<compile_context>
chip_gen: v7x
topology: tpu7x:2x2x1
jax: 0.10.0
libtpu: 0.0.40
codegen_flags: <defaults>
</compile_context>

<pallas_src>
import functools

import jax
import jax.numpy as jnp
import numpy as np
from jax.experimental import pallas as pl
from jax.experimental.pallas import tpu as pltpu

LANE = 128


def _round_up(x, m):
    return (x + m - 1) // m * m


def _poly_cp_kernel(coef_ref, x_ref, w_ref, out_ref, *, rank, poly_order):
    """One batch tile of the CP polynomial regression forward.

    coef_ref : SMEM (poly_order + 2,) f32   [beta, C_sin, C_1, ..., C_P]
    x_ref    : VMEM (TB, D) bf16            current batch tile (bf16-stored in HBM)
    w_ref    : VMEM (D, 128) bf16           all CP factors packed along lanes (zero padded)
    out_ref  : VMEM (TB, 1) f32
    """
    x_bf = x_ref[...]                                           # (TB, D) bf16

    # All factor dot-products in one bf16 MXU matmul with f32 accumulation.
    dots = jnp.dot(x_bf, w_ref[...],
                   preferred_element_type=jnp.float32)          # (TB, 128) f32

    beta = coef_ref[0]
    c_sin = coef_ref[1]

    # beta + C_sin * sum(sin(x)); sin computed in f32 (portable to v5e; dominates output).
    sin_sum = jnp.sin(x_bf.astype(jnp.float32)).sum(axis=-1, keepdims=True)   # (TB, 1)
    result = beta + c_sin * sin_sum

    # Each factor's dot-products occupy a disjoint rank-wide lane segment of `dots`
    # (padding lanes are zero and never touched).  Accumulate the C_j-scaled per-order
    # products into one (TB, rank) buffer so the cross-lane reduce happens exactly once.
    acc = jnp.zeros((x_bf.shape[0], rank), jnp.float32)
    off = 0
    for j in range(poly_order):
        order = j + 1
        prod = dots[:, off * rank:(off + 1) * rank]
        for i in range(1, order):
            prod = prod * dots[:, (off + i) * rank:(off + i + 1) * rank]
        acc = acc + coef_ref[2 + j] * prod
        off += order

    result = result + acc.sum(axis=-1, keepdims=True)
    out_ref[...] = result


def poly_tensor_regression_forward(x, U, C_list, beta, c_sin, *,
                                   rank, poly_order,
                                   reg_lambda_w=0.01, reg_lambda_c=0.05,
                                   tile_b=512):
    """Pallas forward for PolyTensorRegression (cp / regression).

    x      : (B, C, H, W) float (NCHW, flattened internally like torch .view(B, -1))
    U      : list over orders; U[j] is a list of (j+1) factor matrices of shape (D, rank)
    C_list : list of poly_order scalars (shape (1,))
    beta   : shape (1,)
    c_sin  : shape (1,)
    returns (result (B,), total_reg scalar)
    """
    B = x.shape[0]
    # bf16 HBM storage of x: halves the dominant DMA traffic (kernel is HBM-bound on x).
    x2d = x.reshape(B, -1).astype(jnp.bfloat16)
    D = x2d.shape[1]

    n_factors = poly_order * (poly_order + 1) // 2
    used_lanes = n_factors * rank
    # TODO(synk): if n_factors*rank > 128, the factors would need several lane blocks.
    assert 0 < used_lanes <= LANE, "packed CP factors must fit one 128-lane block"

    # Pack every factor matrix side-by-side along the lane axis; pad to 128 lanes with
    # zeros; cast to bf16 for the MXU (accumulation stays f32 in the kernel).
    W_used = jnp.concatenate([u.astype(jnp.float32) for U_j in U for u in U_j], axis=1)
    W_all = jnp.pad(W_used, ((0, 0), (0, LANE - used_lanes))).astype(jnp.bfloat16)

    coef = jnp.concatenate(
        [beta.reshape(1), c_sin.reshape(1)] + [c.reshape(1) for c in C_list]
    ).astype(jnp.float32)                                      # (poly_order + 2,)

    # --- batch tiling ---------------------------------------------------------------
    # Aim for >=2 grid tiles when the batch allows it (v7x megacore: a 1-tile grid leaves
    # a TensorCore idle); otherwise take tile_b rows per step, 8-row aligned.
    TB = _round_up(min(tile_b, max(8, -(-B // 2))), 8)
    # Cap TB so the pipeline working set (double-buffered bf16 x rows + f32 sin
    # intermediates + dots + resident W) stays well inside a 32 MiB scoped-VMEM budget,
    # which is safe on v7x (64 MiB physical) as well as v5e/v6e (128 MiB).
    row_bytes = 2 * D * 2 + 2 * D * 4 + LANE * 4
    vmem_budget = 24 * 1024 * 1024 - 4 * D * LANE * 2
    max_tb = max(8, (vmem_budget // row_bytes) // 8 * 8)
    TB = min(TB, max_tb)

    B_pad = _round_up(B, TB)
    if B_pad != B:
        x2d = jnp.pad(x2d, ((0, B_pad - B), (0, 0)))           # zero rows -> result = beta
    n_tiles = B_pad // TB

    kernel = functools.partial(_poly_cp_kernel, rank=rank, poly_order=poly_order)

    cost = pl.CostEstimate(
        flops=2 * B_pad * D * LANE + 8 * B_pad * LANE,
        transcendentals=B_pad * D,
        bytes_accessed=B_pad * D * 2 + D * LANE * 2 + B_pad * 4,
    )

    out = pl.pallas_call(
        kernel,
        out_shape=jax.ShapeDtypeStruct((B_pad, 1), jnp.float32),
        grid=(n_tiles,),
        in_specs=[
            pl.BlockSpec(memory_space=pltpu.MemorySpace.SMEM),   # coef scalars
            pl.BlockSpec((TB, D), lambda i: (i, 0)),             # x batch tile (bf16)
            pl.BlockSpec((D, LANE), lambda i: (0, 0)),           # packed factors (resident)
        ],
        out_specs=pl.BlockSpec((TB, 1), lambda i: (i, 0)),
        compiler_params=pltpu.CompilerParams(
            dimension_semantics=("parallel",),                   # shards B tiles across TCs on v7x
            vmem_limit_bytes=32 * 1024 * 1024),
        cost_estimate=cost,
    )(coef, x2d, W_all)

    # Regularization depends only on parameters, not on x -> plain XLA in the wrapper
    # (never recomputed inside the hot kernel / per batch tile).
    reg_w = jnp.float32(0.0)
    for factors in U:
        fp = sum(int(f.size) for f in factors)
        reg_w = reg_w + reg_lambda_w * sum(jnp.abs(f).sum() for f in factors) / fp
    reg_c = reg_lambda_c * (sum(jnp.abs(c[0]) for c in C_list) + jnp.abs(c_sin[0]))
    total_reg = reg_w + reg_c

    return out[:B, 0], total_reg


def _reference_forward(x, U, C_list, beta, c_sin, *,
                       reg_lambda_w=0.01, reg_lambda_c=0.05):
    """Pure-JAX f32 replica of the PyTorch forward (cp / regression) for validation."""
    B = x.shape[0]
    x2d = x.reshape(B, -1).astype(jnp.float32)
    result = jnp.full((B,), beta[0], jnp.float32)
    reg_w = jnp.float32(0.0)
    for j, factors in enumerate(U):
        dots = [x2d @ f for f in factors]                 # each (B, rank)
        prod = dots[0]
        for d in dots[1:]:
            prod = prod * d
        term = prod.sum(axis=-1)                          # sum over rank
        result = result + C_list[j][0] * term
        fp = sum(int(f.size) for f in factors)
        reg_w = reg_w + reg_lambda_w * sum(jnp.abs(f).sum() for f in factors) / fp
    result = result + c_sin[0] * jnp.sin(x2d).sum(axis=-1)
    reg_c = reg_lambda_c * (sum(jnp.abs(c[0]) for c in C_list) + jnp.abs(c_sin[0]))
    return result, reg_w + reg_c


if __name__ == "__main__":
    # Module hyper-parameters (CP decomposition, regression head).
    rank, poly_order = 4, 3
    reg_lambda_w, reg_lambda_c = 0.01, 0.05

    # Small NCHW input; B=20 exercises batch padding and a 2-tile "parallel" grid
    # (both TensorCores on v7x).  tile_b is left at its (large) default per the review.
    B, Cc, H, Wd = 20, 4, 16, 16
    D = Cc * H * Wd

    key = jax.random.PRNGKey(0)
    keys = jax.random.split(key, 16)

    x = jax.random.normal(keys[0], (B, Cc, H, Wd), jnp.float32)

    # Deterministic synthetic parameter init (shapes follow __init__/initialize_factor_u).
    C_list = [jax.random.normal(keys[1 + j], (1,), jnp.float32) for j in range(poly_order)]
    beta = jax.random.normal(keys[4], (1,), jnp.float32)
    c_sin = jax.random.normal(keys[5], (1,), jnp.float32)

    U = []
    kidx = 6
    for order in range(1, poly_order + 1):
        U_j = []
        for _ in range(order):
            # scaled randn keeps the polynomial terms numerically well-conditioned
            U_j.append(0.02 * jax.random.normal(keys[kidx], (D, rank), jnp.float32))
            kidx += 1
        U.append(U_j)

    fwd = jax.jit(functools.partial(
        poly_tensor_regression_forward,
        rank=rank, poly_order=poly_order,
        reg_lambda_w=reg_lambda_w, reg_lambda_c=reg_lambda_c))

    out, total_reg = fwd(x, U, C_list, beta, c_sin)
    jax.block_until_ready((out, total_reg))

    ref_out, ref_reg = _reference_forward(
        x, U, C_list, beta, c_sin,
        reg_lambda_w=reg_lambda_w, reg_lambda_c=reg_lambda_c)

    # Tolerance documents the bf16 x-storage / bf16 MXU path (~1e-2 parity vs f32 reference).
    np.testing.assert_allclose(np.asarray(out), np.asarray(ref_out),
                               rtol=1.5e-2,
                               atol=1.5e-2 * float(np.abs(ref_out).max() + 1.0))
    np.testing.assert_allclose(float(total_reg), float(ref_reg), rtol=1e-3, atol=1e-5)

    print("KERNEL_OK")
</pallas_src>

<mosaic_0001>
module attributes {stable_mosaic.version = 11 : i64} {
  func.func @_poly_cp_kernel(%arg0: i32, %arg1: memref<5xf32, #tpu.memory_space<smem>>, %arg2: memref<16x1024xbf16, #tpu.memory_space<vmem>>, %arg3: memref<1024x128xbf16, #tpu.memory_space<vmem>>, %arg4: memref<16x1xf32, #tpu.memory_space<vmem>>) attributes {dimension_semantics = [#tpu.dimension_semantics<parallel>], iteration_bounds = array<i64: 2>, scalar_prefetch = 0 : i64, scratch_operands = 0 : i64, tpu.core_type = #tpu.core_type<tc>, window_params = [{transform_indices = @transform_0, window_bounds = array<i64: 5>}, {transform_indices = @transform_1, window_bounds = array<i64: 16, 1024>}, {pipeline_mode = #tpu.pipeline_mode<synchronous>, transform_indices = @transform_2, window_bounds = array<i64: 1024, 128>}, {transform_indices = @transform_3, window_bounds = array<i64: 16, 1>}]} {
    %c0 = arith.constant 0 : index
    %c0_0 = arith.constant 0 : index
    %0 = vector.load %arg2[%c0, %c0_0] : memref<16x1024xbf16, #tpu.memory_space<vmem>>, vector<16x1024xbf16>
    %c0_1 = arith.constant 0 : index
    %c0_2 = arith.constant 0 : index
    %1 = vector.load %arg3[%c0_1, %c0_2] : memref<1024x128xbf16, #tpu.memory_space<vmem>>, vector<1024x128xbf16>
    %cst = arith.constant dense<0.000000e+00> : vector<16x128xf32>
    %2 = tpu.matmul %0, %1, %cst {dimension_numbers = #tpu.dot_dimension_numbers<[1], [0], [0], [1], [0, 0, 1, 1], [], []>} : vector<16x1024xbf16>, vector<1024x128xbf16>, vector<16x128xf32> -> vector<16x128xf32>
    %c0_3 = arith.constant 0 : index
    %3 = memref.load %arg1[%c0_3] : memref<5xf32, #tpu.memory_space<smem>>
    %c1 = arith.constant 1 : index
    %4 = memref.load %arg1[%c1] : memref<5xf32, #tpu.memory_space<smem>>
    %5 = arith.extf %0 : vector<16x1024xbf16> to vector<16x1024xf32>
    %6 = math.sin %5 : vector<16x1024xf32>
    %cst_4 = arith.constant dense<0.000000e+00> : vector<16xf32>
    %7 = vector.multi_reduction <add>, %6, %cst_4 [1] : vector<16x1024xf32> to vector<16xf32>
    %8 = vector.shape_cast %7 : vector<16xf32> to vector<16x1xf32>
    %9 = vector.broadcast %4 : f32 to vector<16x1xf32>
    %10 = arith.mulf %9, %8 : vector<16x1xf32>
    %11 = vector.broadcast %3 : f32 to vector<16x1xf32>
    %12 = arith.addf %11, %10 : vector<16x1xf32>
    %cst_5 = arith.constant 0.000000e+00 : f32
    %13 = vector.broadcast %cst_5 : f32 to vector<16x4xf32>
    %14 = vector.extract_strided_slice %2 {offsets = [0, 0], sizes = [16, 4], strides = [1, 1]} : vector<16x128xf32> to vector<16x4xf32>
    %c2 = arith.constant 2 : index
    %15 = memref.load %arg1[%c2] : memref<5xf32, #tpu.memory_space<smem>>
    %16 = vector.broadcast %15 : f32 to vector<16x4xf32>
    %17 = arith.mulf %16, %14 : vector<16x4xf32>
    %18 = arith.addf %13, %17 : vector<16x4xf32>
    %19 = vector.extract_strided_slice %2 {offsets = [0, 4], sizes = [16, 4], strides = [1, 1]} : vector<16x128xf32> to vector<16x4xf32>
    %20 = vector.extract_strided_slice %2 {offsets = [0, 8], sizes = [16, 4], strides = [1, 1]} : vector<16x128xf32> to vector<16x4xf32>
    %21 = arith.mulf %19, %20 : vector<16x4xf32>
    %c3 = arith.constant 3 : index
    %22 = memref.load %arg1[%c3] : memref<5xf32, #tpu.memory_space<smem>>
    %23 = vector.broadcast %22 : f32 to vector<16x4xf32>
    %24 = arith.mulf %23, %21 : vector<16x4xf32>
    %25 = arith.addf %18, %24 : vector<16x4xf32>
    %26 = vector.extract_strided_slice %2 {offsets = [0, 12], sizes = [16, 4], strides = [1, 1]} : vector<16x128xf32> to vector<16x4xf32>
    %27 = vector.extract_strided_slice %2 {offsets = [0, 16], sizes = [16, 4], strides = [1, 1]} : vector<16x128xf32> to vector<16x4xf32>
    %28 = arith.mulf %26, %27 : vector<16x4xf32>
    %29 = vector.extract_strided_slice %2 {offsets = [0, 20], sizes = [16, 4], strides = [1, 1]} : vector<16x128xf32> to vector<16x4xf32>
    %30 = arith.mulf %28, %29 : vector<16x4xf32>
    %c4 = arith.constant 4 : index
    %31 = memref.load %arg1[%c4] : memref<5xf32, #tpu.memory_space<smem>>
    %32 = vector.broadcast %31 : f32 to vector<16x4xf32>
    %33 = arith.mulf %32, %30 : vector<16x4xf32>
    %34 = arith.addf %25, %33 : vector<16x4xf32>
    %cst_6 = arith.constant dense<0.000000e+00> : vector<16xf32>
    %35 = vector.multi_reduction <add>, %34, %cst_6 [1] : vector<16x4xf32> to vector<16xf32>
    %36 = vector.shape_cast %35 : vector<16xf32> to vector<16x1xf32>
    %37 = arith.addf %12, %36 : vector<16x1xf32>
    %c0_7 = arith.constant 0 : index
    %c0_8 = arith.constant 0 : index
    %38 = vector.load %arg4[%c0_7, %c0_8] : memref<16x1xf32, #tpu.memory_space<vmem>>, vector<16x1xf32>
    tpu.vector_store %arg4[%c0_7, %c0_8], %37 {strides = array<i32>} : memref<16x1xf32, #tpu.memory_space<vmem>>, vector<16x1xf32>,
    return
  }
  func.func @transform_0(%arg0: i32) -> i32 {
    %c0_i32 = arith.constant 0 : i32
    %c0_i32_0 = arith.constant 0 : i32
    return %c0_i32 : i32
  }
  func.func @transform_1(%arg0: i32) -> (i32, i32) {
    %c0_i32 = arith.constant 0 : i32
    %c0_i32_0 = arith.constant 0 : i32
    return %arg0, %c0_i32 : i32, i32
  }
  func.func @transform_2(%arg0: i32) -> (i32, i32) {
    %c0_i32 = arith.constant 0 : i32
    %c0_i32_0 = arith.constant 0 : i32
    %c0_i32_1 = arith.constant 0 : i32
    return %c0_i32, %c0_i32_0 : i32, i32
  }
  func.func @transform_3(%arg0: i32) -> (i32, i32) {
    %c0_i32 = arith.constant 0 : i32
    %c0_i32_0 = arith.constant 0 : i32
    return %arg0, %c0_i32 : i32, i32
  }
}

</mosaic_0001>

<llo_original>
// kernel: poly_tensor_regression_forward.1
$region0: #{poly_tensor_regression_forward.1}
  #allocation0 [shape = 'u32[]', space=smem, size = 0x4, offset = 0x4, fixed_abs, tag = 'smem constant byte address 0x4 - core index']
  #allocation1 [shape = 'u32[144,128]{1,0:T(1,128)}', space=vmem, size = 0x12000, scoped, tag = 'internal scratch']
  %s0 = inlined_call_operand.vmem [shape: f32[5], index: 0, kind: input, shape index: {}]
  %s1 = inlined_call_operand.vmem [shape: bf16[32,1024], index: 1, kind: input, shape index: {}]
  %s2 = inlined_call_operand.vmem [shape: bf16[1024,128], index: 2, kind: input, shape index: {}]
  %s3 = inlined_call_operand.vmem [shape: f32[32,1], index: 3, kind: output, shape index: {}]
  %s4 = sld [smem:[#allocation0]]
  $region49: #{poly_tensor_regression_forward.1} parent=0
    _
  %s6 = ssub.s32 1, %s4
  %s7 = scalar_select 0, %s6, %s4
  $region1: #{poly_tensor_regression_forward.1} parent=0
    #allocation2 [shape = 'u8[512]{0}', space=smem, size = 0x200, scoped, tag = 'input window, operand 0, single buffered']
    #allocation3 [shape = 's32[2]{0}', space=sflag, size = 0x8, scoped, tag = 'scoped memory for poly_tensor_regression_forward.1']
    %8 = vsyncpa [#allocation3], 0
    loop: start=0, step=1, limit=4
    $region2: #{poly_tensor_regression_forward.1} parent=1 // loop_pre_header
      _
    $region3: #{poly_tensor_regression_forward.1} parent=1 // loop_header
      %s10 = sphi 0, %s14
      %p11 = scmp.ge.s32.totalorder %s10, 4
      %s18 = sphi 0, %s18
      %s20 = sphi 0, %s18
      %s21 = sphi 0, %s20
      %s35 = sphi 0, %s21
      %s41 = sphi 0, %s43
      %s44 = sphi 0, %s41
      %s45 = sphi 0, %s44
      %s61 = sphi 0, %s45
      %s65 = sphi 0, %s65
      %s67 = sphi 0, %s65
      %s68 = sphi 0, %s67
      %s82 = sphi 0, %s68
      %s88 = sphi 0, %s90
      %s91 = sphi 0, %s88
      %s92 = sphi 0, %s91
      %s108 = sphi 0, %s92
    $region4: #{poly_tensor_regression_forward.1} parent=1 // loop_header_branch
      %13 = sbr.rel (%p11) target = $region8
    $region5: #{poly_tensor_regression_forward.1} parent=1 // loop_body
      %s15 = ssub.s32 %s10, 1
      %s16 = ssub.s32 %s10, 2
      %s17 = sadd.s32 %s10, 1
      %s19 = sadd.s32 %s18, 1
      %p22 = scmp.eq.s32.totalorder %s10, 1
      %p23 = scmp.ne.s32.totalorder %s18, %s20
      %p24 = scmp.eq.s32.totalorder %s10, 0
      %p25 = por %p23, %p24
      %p26 = scmp.ne.s32.totalorder %s18, %s20
      %p27 = scmp.eq.s32.totalorder %s15, 1
      %p28 = por %p26, %p27
      %p29 = scmp.ne.s32.totalorder %s20, %s21
      %p30 = scmp.eq.s32.totalorder %s15, 0
      %p31 = por %p29, %p30
      %p32 = scmp.ne.s32.totalorder %s20, %s21
      %p33 = scmp.eq.s32.totalorder %s16, 1
      %p34 = por %p32, %p33
      %p36 = scmp.ne.s32.totalorder %s21, %s35
      %p37 = scmp.eq.s32.totalorder %s16, 0
      %p38 = por %p36, %p37
      %s39 = ssub.s32 %s10, %s17
      %p40 = scmp.eq.s32.totalorder %s39, 0
      %s42 = sadd.s32 %s41, 1
      %s43 = scalar_select %p40, %s41, %s42
      %p46 = pneg %p40
      %p47 = scmp.eq.s32.totalorder %s10, 1
      %p48 = por %p46, %p47
      %p49 = scmp.ne.s32.totalorder %s41, %s44
      %p50 = scmp.eq.s32.totalorder %s10, 0
      %p51 = por %p49, %p50
      %p52 = scmp.ne.s32.totalorder %s41, %s44
      %p53 = scmp.eq.s32.totalorder %s15, 1
      %p54 = por %p52, %p53
      %p55 = scmp.ne.s32.totalorder %s44, %s45
      %p56 = scmp.eq.s32.totalorder %s15, 0
      %p57 = por %p55, %p56
      %p58 = scmp.ne.s32.totalorder %s44, %s45
      %p59 = scmp.eq.s32.totalorder %s16, 1
      %p60 = por %p58, %p59
      %p62 = scmp.ne.s32.totalorder %s45, %s61
      %p63 = scmp.eq.s32.totalorder %s16, 0
      %p64 = por %p62, %p63
      %s66 = sadd.s32 %s65, 1
      %p69 = scmp.eq.s32.totalorder %s10, 1
      %p70 = scmp.ne.s32.totalorder %s65, %s67
      %p71 = scmp.eq.s32.totalorder %s10, 0
      %p72 = por %p70, %p71
      %p73 = scmp.ne.s32.totalorder %s65, %s67
      %p74 = scmp.eq.s32.totalorder %s15, 1
      %p75 = por %p73, %p74
      %p76 = scmp.ne.s32.totalorder %s67, %s68
      %p77 = scmp.eq.s32.totalorder %s15, 0
      %p78 = por %p76, %p77
      %p79 = scmp.ne.s32.totalorder %s67, %s68
      %p80 = scmp.eq.s32.totalorder %s16, 1
      %p81 = por %p79, %p80
      %p83 = scmp.ne.s32.totalorder %s68, %s82
      %p84 = scmp.eq.s32.totalorder %s16, 0
      %p85 = por %p83, %p84
      %s86 = ssub.s32 %s10, %s17
      %p87 = scmp.eq.s32.totalorder %s86, 0
      %s89 = sadd.s32 %s88, 1
      %s90 = scalar_select %p87, %s88, %s89
      %p93 = pneg %p87
      %p94 = scmp.eq.s32.totalorder %s10, 1
      %p95 = por %p93, %p94
      %p96 = scmp.ne.s32.totalorder %s88, %s91
      %p97 = scmp.eq.s32.totalorder %s10, 0
      %p98 = por %p96, %p97
      %p99 = scmp.ne.s32.totalorder %s88, %s91
      %p100 = scmp.eq.s32.totalorder %s15, 1
      %p101 = por %p99, %p100
      %p102 = scmp.ne.s32.totalorder %s91, %s92
      %p103 = scmp.eq.s32.totalorder %s15, 0
      %p104 = por %p102, %p103
      %p105 = scmp.ne.s32.totalorder %s91, %s92
      %p106 = scmp.eq.s32.totalorder %s16, 1
      %p107 = por %p105, %p106
      %p109 = scmp.ne.s32.totalorder %s92, %s108
      %p110 = scmp.eq.s32.totalorder %s16, 0
      %p111 = por %p109, %p110
      %p112 = scmp.le.s32.totalorder 1, %s10
      %p113 = scmp.lt.s32.totalorder %s10, 3
      %p114 = pnand %p112, %p113
      %p115 = pneg %p114
      // Predicated region
      $region9: #{poly_tensor_regression_forward.1} parent=5 // pred_check
        _
      $region10: #{poly_tensor_regression_forward.1} parent=5 // pred_check_branch
        %117 = sbr.rel (%p114) target = $region12
      $region11: #{poly_tensor_regression_forward.1} parent=5 // pred_region
        %s118 = ssub.s32 %s10, 1
        // Predicated region
        $region13: #{poly_tensor_regression_forward.1} parent=11 // pred_check
          %p119 = pneg %p31
        $region14: #{poly_tensor_regression_forward.1} parent=11 // pred_check_branch
          %121 = sbr.rel (%p119) target = $region16
        $region15: #{poly_tensor_regression_forward.1} parent=11 // pred_region
          %s123 = ssub.s32 16, 16
          %124 = vsyncadd [#allocation3], %s123
          %s126 = sshll.u32 %s0, 4
          %s127 = int_to_ptr.vmem [resolvable:$true] %s126
          %129 = dma.vmem_to_smem %s127, 16, [#allocation2], [#allocation3]
        $region16: #{poly_tensor_regression_forward.1} parent=11 // pred_fallthru
          _
        // Predicated region
        $region17: #{poly_tensor_regression_forward.1} parent=11 // pred_check
          %p130 = pneg %p78
        $region18: #{poly_tensor_regression_forward.1} parent=11 // pred_check_branch
          %132 = sbr.rel (%p130) target = $region20
        $region19: #{poly_tensor_regression_forward.1} parent=11 // pred_region
          _
        $region20: #{poly_tensor_regression_forward.1} parent=11 // pred_fallthru
          _
      $region12: #{poly_tensor_regression_forward.1} parent=5 // pred_fallthru
        _
      %p133 = scmp.lt.s32.totalorder %s10, 2
      // Predicated region
      $region21: #{poly_tensor_regression_forward.1} parent=5 // pred_check
        %p134 = pneg %p133
      $region22: #{poly_tensor_regression_forward.1} parent=5 // pred_check_branch
        %136 = sbr.rel (%p134) target = $region24
      $region23: #{poly_tensor_regression_forward.1} parent=5 // pred_region
        // Predicated region
        $region25: #{poly_tensor_regression_forward.1} parent=23 // pred_check
          %p137 = pneg %p51
        $region26: #{poly_tensor_regression_forward.1} parent=23 // pred_check_branch
          %139 = sbr.rel (%p137) target = $region28
        $region27: #{poly_tensor_regression_forward.1} parent=23 // pred_region
          %s140 = smul.u32 2, %s10
          %p141 = scmp.lt.s32.totalorder %s140, 3
          %s142 = scalar_select %p141, %s140, 3
          %s143 = smul.addr %s142, 8
          %s144 = smul.addr %s143, 4
          %s145 = scalar_lea.vmem %s1, %s144
          %s146 = smul.u32 2, %s10
        $region28: #{poly_tensor_regression_forward.1} parent=23 // pred_fallthru
          _
      $region24: #{poly_tensor_regression_forward.1} parent=5 // pred_fallthru
        _
      %p147 = scmp.le.s32.totalorder 1, %s10
      %p148 = scmp.lt.s32.totalorder %s10, 3
      %p149 = pnand %p147, %p148
      %p150 = pneg %p149
      // Predicated region
      $region29: #{poly_tensor_regression_forward.1} parent=5 // pred_check
        _
      $region30: #{poly_tensor_regression_forward.1} parent=5 // pred_check_branch
        %152 = sbr.rel (%p149) target = $region32
      $region31: #{poly_tensor_regression_forward.1} parent=5 // pred_region
        %s153 = ssub.s32 %s10, 1
        // Predicated region
        $region33: #{poly_tensor_regression_forward.1} parent=31 // pred_check
          %p154 = pneg %p31
        $region34: #{poly_tensor_regression_forward.1} parent=31 // pred_check_branch
          %156 = sbr.rel (%p154) target = $region36
        $region35: #{poly_tensor_regression_forward.1} parent=31 // pred_region
          %157 = dma.done [#allocation3], 16
        $region36: #{poly_tensor_regression_forward.1} parent=31 // pred_fallthru
          _
        %158 = sfence
        %p159 = pneg %p31
        %p160 = pneg %p28
        %s161 = smul.u32 2, %s15
        %p162 = scmp.lt.s32.totalorder %s161, 3
        %s163 = scalar_select %p162, %s161, 3
        %s164 = smul.addr %s163, 8
        %s165 = smul.addr %s164, 4
        %s166 = scalar_lea.vmem %s1, %s165
        %p167 = pneg %p57
        %p168 = pneg %p54
        %p169 = pneg %p78
        %p170 = pneg %p75
        %p171 = pneg %p104
        %p172 = pneg %p101
        %s173 = smul.u32 2, %s15
        %p174 = scmp.lt.s32.totalorder %s173, 3
        %s175 = scalar_select %p174, %s173, 3
        %s176 = smul.addr %s175, 8
        %s177 = scalar_lea.vmem %s3, %s176
        %s178 = smul.u32 2, %s15
        %p179 = scmp.lt.s32.totalorder %s178, 3
        %s180 = scalar_select %p179, %s178, 3
        %s181 = smul.addr %s180, 8
        %s182 = smul.addr %s181, 4
        %s183 = scalar_lea.vmem %s1, %s182
        %s184 = smul.u32 2, %s15
        %s185 = smul.u32 2, %s15
        %p186 = scmp.lt.s32.totalorder %s185, 3
        %s187 = scalar_select %p186, %s185, 3
        %s188 = smul.addr %s187, 8
        %s189 = scalar_lea.vmem %s3, %s188
        %s190 = smul.u32 2, %s15
        %v192 = vld [vmem:[%s183] sm:$0xff]
        %v193 = vld [vmem:[%s183 + $0x8] sm:$0xff]
        %v194 = vld [vmem:[%s183 + $0x10] sm:$0xff]
        %v195 = vld [vmem:[%s183 + $0x18] sm:$0xff]
        %v196 = vld [vmem:[%s183 + $0x20] sm:$0xff]
        %v197 = vld [vmem:[%s183 + $0x28] sm:$0xff]
        %v198 = vld [vmem:[%s183 + $0x30] sm:$0xff]
        %v199 = vld [vmem:[%s183 + $0x38] sm:$0xff]
        %v200 = vld [vmem:[%s2] sm:$0xf]
        %v201 = vld [vmem:[%s2 + $0x4] sm:$0xf]
        %v202 = vld [vmem:[%s2 + $0x8] sm:$0xf]
        %v203 = vld [vmem:[%s2 + $0xc] sm:$0xf]
        %v204 = vld [vmem:[%s2 + $0x10] sm:$0xf]
        %v205 = vld [vmem:[%s2 + $0x14] sm:$0xf]
        %v206 = vld [vmem:[%s2 + $0x18] sm:$0xf]
        %v207 = vld [vmem:[%s2 + $0x1c] sm:$0xf]
        %v208 = vld [vmem:[%s2 + $0x20] sm:$0xf]
        %v209 = vld [vmem:[%s2 + $0x24] sm:$0xf]
        %v210 = vld [vmem:[%s2 + $0x28] sm:$0xf]
        %v211 = vld [vmem:[%s2 + $0x2c] sm:$0xf]
        %v212 = vld [vmem:[%s2 + $0x30] sm:$0xf]
        %v213 = vld [vmem:[%s2 + $0x34] sm:$0xf]
        %v214 = vld [vmem:[%s2 + $0x38] sm:$0xf]
        %v215 = vld [vmem:[%s2 + $0x3c] sm:$0xf]
        %v216 = vld [vmem:[%s2 + $0x40] sm:$0xf]
        %v217 = vld [vmem:[%s2 + $0x44] sm:$0xf]
        %v218 = vld [vmem:[%s2 + $0x48] sm:$0xf]
        %v219 = vld [vmem:[%s2 + $0x4c] sm:$0xf]
        %v220 = vld [vmem:[%s2 + $0x50] sm:$0xf]
        %v221 = vld [vmem:[%s2 + $0x54] sm:$0xf]
        %v222 = vld [vmem:[%s2 + $0x58] sm:$0xf]
        %v223 = vld [vmem:[%s2 + $0x5c] sm:$0xf]
        %v224 = vld [vmem:[%s2 + $0x60] sm:$0xf]
        %v225 = vld [vmem:[%s2 + $0x64] sm:$0xf]
        %v226 = vld [vmem:[%s2 + $0x68] sm:$0xf]
        %v227 = vld [vmem:[%s2 + $0x6c] sm:$0xf]
        %v228 = vld [vmem:[%s2 + $0x70] sm:$0xf]
        %v229 = vld [vmem:[%s2 + $0x74] sm:$0xf]
        %v230 = vld [vmem:[%s2 + $0x78] sm:$0xf]
        %v231 = vld [vmem:[%s2 + $0x7c] sm:$0xf]
        %v232 = vld [vmem:[%s2 + $0x80] sm:$0xf]
        %v233 = vld [vmem:[%s2 + $0x84] sm:$0xf]
        %v234 = vld [vmem:[%s2 + $0x88] sm:$0xf]
        %v235 = vld [vmem:[%s2 + $0x8c] sm:$0xf]
        %v236 = vld [vmem:[%s2 + $0x90] sm:$0xf]
        %v237 = vld [vmem:[%s2 + $0x94] sm:$0xf]
        %v238 = vld [vmem:[%s2 + $0x98] sm:$0xf]
        %v239 = vld [vmem:[%s2 + $0x9c] sm:$0xf]
        %v240 = vld [vmem:[%s2 + $0xa0] sm:$0xf]
        %v241 = vld [vmem:[%s2 + $0xa4] sm:$0xf]
        %v242 = vld [vmem:[%s2 + $0xa8] sm:$0xf]
        %v243 = vld [vmem:[%s2 + $0xac] sm:$0xf]
        %v244 = vld [vmem:[%s2 + $0xb0] sm:$0xf]
        %v245 = vld [vmem:[%s2 + $0xb4] sm:$0xf]
        %v246 = vld [vmem:[%s2 + $0xb8] sm:$0xf]
        %v247 = vld [vmem:[%s2 + $0xbc] sm:$0xf]
        %v248 = vld [vmem:[%s2 + $0xc0] sm:$0xf]
        %v249 = vld [vmem:[%s2 + $0xc4] sm:$0xf]
        %v250 = vld [vmem:[%s2 + $0xc8] sm:$0xf]
        %v251 = vld [vmem:[%s2 + $0xcc] sm:$0xf]
        %v252 = vld [vmem:[%s2 + $0xd0] sm:$0xf]
        %v253 = vld [vmem:[%s2 + $0xd4] sm:$0xf]
        %v254 = vld [vmem:[%s2 + $0xd8] sm:$0xf]
        %v255 = vld [vmem:[%s2 + $0xdc] sm:$0xf]
        %v256 = vld [vmem:[%s2 + $0xe0] sm:$0xf]
        %v257 = vld [vmem:[%s2 + $0xe4] sm:$0xf]
        %v258 = vld [vmem:[%s2 + $0xe8] sm:$0xf]
        %v259 = vld [vmem:[%s2 + $0xec] sm:$0xf]
        %v260 = vld [vmem:[%s2 + $0xf0] sm:$0xf]
        %v261 = vld [vmem:[%s2 + $0xf4] sm:$0xf]
        %v262 = vld [vmem:[%s2 + $0xf8] sm:$0xf]
        %v263 = vld [vmem:[%s2 + $0xfc] sm:$0xf]
        %v264 = vld [vmem:[%s2 + $0x100] sm:$0xf]
        %v265 = vld [vmem:[%s2 + $0x104] sm:$0xf]
        %v266 = vld [vmem:[%s2 + $0x108] sm:$0xf]
        %v267 = vld [vmem:[%s2 + $0x10c] sm:$0xf]
        %v268 = vld [vmem:[%s2 + $0x110] sm:$0xf]
        %v269 = vld [vmem:[%s2 + $0x114] sm:$0xf]
        %v270 = vld [vmem:[%s2 + $0x118] sm:$0xf]
        %v271 = vld [vmem:[%s2 + $0x11c] sm:$0xf]
        %v272 = vld [vmem:[%s2 + $0x120] sm:$0xf]
        %v273 = vld [vmem:[%s2 + $0x124] sm:$0xf]
        %v274 = vld [vmem:[%s2 + $0x128] sm:$0xf]
        %v275 = vld [vmem:[%s2 + $0x12c] sm:$0xf]
        %v276 = vld [vmem:[%s2 + $0x130] sm:$0xf]
        %v277 = vld [vmem:[%s2 + $0x134] sm:$0xf]
        %v278 = vld [vmem:[%s2 + $0x138] sm:$0xf]
        %v279 = vld [vmem:[%s2 + $0x13c] sm:$0xf]
        %v280 = vld [vmem:[%s2 + $0x140] sm:$0xf]
        %v281 = vld [vmem:[%s2 + $0x144] sm:$0xf]
        %v282 = vld [vmem:[%s2 + $0x148] sm:$0xf]
        %v283 = vld [vmem:[%s2 + $0x14c] sm:$0xf]
        %v284 = vld [vmem:[%s2 + $0x150] sm:$0xf]
        %v285 = vld [vmem:[%s2 + $0x154] sm:$0xf]
        %v286 = vld [vmem:[%s2 + $0x158] sm:$0xf]
        %v287 = vld [vmem:[%s2 + $0x15c] sm:$0xf]
        %v288 = vld [vmem:[%s2 + $0x160] sm:$0xf]
        %v289 = vld [vmem:[%s2 + $0x164] sm:$0xf]
        %v290 = vld [vmem:[%s2 + $0x168] sm:$0xf]
        %v291 = vld [vmem:[%s2 + $0x16c] sm:$0xf]
        %v292 = vld [vmem:[%s2 + $0x170] sm:$0xf]
        %v293 = vld [vmem:[%s2 + $0x174] sm:$0xf]
        %v294 = vld [vmem:[%s2 + $0x178] sm:$0xf]
        %v295 = vld [vmem:[%s2 + $0x17c] sm:$0xf]
        %v296 = vld [vmem:[%s2 + $0x180] sm:$0xf]
        %v297 = vld [vmem:[%s2 + $0x184] sm:$0xf]
        %v298 = vld [vmem:[%s2 + $0x188] sm:$0xf]
        %v299 = vld [vmem:[%s2 + $0x18c] sm:$0xf]
        %v300 = vld [vmem:[%s2 + $0x190] sm:$0xf]
        %v301 = vld [vmem:[%s2 + $0x194] sm:$0xf]
        %v302 = vld [vmem:[%s2 + $0x198] sm:$0xf]
        %v303 = vld [vmem:[%s2 + $0x19c] sm:$0xf]
        %v304 = vld [vmem:[%s2 + $0x1a0] sm:$0xf]
        %v305 = vld [vmem:[%s2 + $0x1a4] sm:$0xf]
        %v306 = vld [vmem:[%s2 + $0x1a8] sm:$0xf]
        %v307 = vld [vmem:[%s2 + $0x1ac] sm:$0xf]
        %v308 = vld [vmem:[%s2 + $0x1b0] sm:$0xf]
        %v309 = vld [vmem:[%s2 + $0x1b4] sm:$0xf]
        %v310 = vld [vmem:[%s2 + $0x1b8] sm:$0xf]
        %v311 = vld [vmem:[%s2 + $0x1bc] sm:$0xf]
        %v312 = vld [vmem:[%s2 + $0x1c0] sm:$0xf]
        %v313 = vld [vmem:[%s2 + $0x1c4] sm:$0xf]
        %v314 = vld [vmem:[%s2 + $0x1c8] sm:$0xf]
        %v315 = vld [vmem:[%s2 + $0x1cc] sm:$0xf]
        %v316 = vld [vmem:[%s2 + $0x1d0] sm:$0xf]
        %v317 = vld [vmem:[%s2 + $0x1d4] sm:$0xf]
        %v318 = vld [vmem:[%s2 + $0x1d8] sm:$0xf]
        %v319 = vld [vmem:[%s2 + $0x1dc] sm:$0xf]
        %v320 = vld [vmem:[%s2 + $0x1e0] sm:$0xf]
        %v321 = vld [vmem:[%s2 + $0x1e4] sm:$0xf]
        %v322 = vld [vmem:[%s2 + $0x1e8] sm:$0xf]
        %v323 = vld [vmem:[%s2 + $0x1ec] sm:$0xf]
        %v324 = vld [vmem:[%s2 + $0x1f0] sm:$0xf]
        %v325 = vld [vmem:[%s2 + $0x1f4] sm:$0xf]
        %v326 = vld [vmem:[%s2 + $0x1f8] sm:$0xf]
        %v327 = vld [vmem:[%s2 + $0x1fc] sm:$0xf]
        %v336 = vunpack.c.l.b16 %v192
        %v337 = vunpack.c.h.b16 %v192
        %v338 = vunpack.c.l.b16 %v193
        %v339 = vunpack.c.h.b16 %v193
        %v340 = vunpack.c.l.b16 %v194
        %v341 = vunpack.c.h.b16 %v194
        %v342 = vunpack.c.l.b16 %v195
        %v343 = vunpack.c.h.b16 %v195
        %v344 = vunpack.c.l.b16 %v196
        %v345 = vunpack.c.h.b16 %v196
        %v346 = vunpack.c.l.b16 %v197
        %v347 = vunpack.c.h.b16 %v197
        %v348 = vunpack.c.l.b16 %v198
        %v349 = vunpack.c.h.b16 %v198
        %v350 = vunpack.c.l.b16 %v199
        %v351 = vunpack.c.h.b16 %v199
        %v352 = vpack.c.b16 %v344, %v336
        %v353 = vpack.c.b16 %v345, %v337
        %v354 = vpack.c.b16 %v346, %v338
        %v355 = vpack.c.b16 %v347, %v339
        %v356 = vpack.c.b16 %v348, %v340
        %v357 = vpack.c.b16 %v349, %v341
        %v358 = vpack.c.b16 %v350, %v342
        %v359 = vpack.c.b16 %v351, %v343
        %v496 = vunpack.c.l.b16 %v200
        %v497 = vunpack.c.l.b16 %v201
        %v498 = vunpack.c.l.b16 %v202
        %v499 = vunpack.c.l.b16 %v203
        %v500 = vunpack.c.l.b16 %v204
        %v501 = vunpack.c.l.b16 %v205
        %v502 = vunpack.c.l.b16 %v206
        %v503 = vunpack.c.l.b16 %v207
        %v504 = vunpack.c.l.b16 %v208
        %v505 = vunpack.c.l.b16 %v209
        %v506 = vunpack.c.l.b16 %v210
        %v507 = vunpack.c.l.b16 %v211
        %v508 = vunpack.c.l.b16 %v212
        %v509 = vunpack.c.l.b16 %v213
        %v510 = vunpack.c.l.b16 %v214
        %v511 = vunpack.c.l.b16 %v215
        %v512 = vunpack.c.l.b16 %v216
        %v513 = vunpack.c.l.b16 %v217
        %v514 = vunpack.c.l.b16 %v218
        %v515 = vunpack.c.l.b16 %v219
        %v516 = vunpack.c.l.b16 %v220
        %v517 = vunpack.c.l.b16 %v221
        %v518 = vunpack.c.l.b16 %v222
        %v519 = vunpack.c.l.b16 %v223
        %v520 = vunpack.c.l.b16 %v224
        %v521 = vunpack.c.l.b16 %v225
        %v522 = vunpack.c.l.b16 %v226
        %v523 = vunpack.c.l.b16 %v227
        %v524 = vunpack.c.l.b16 %v228
        %v525 = vunpack.c.l.b16 %v229
        %v526 = vunpack.c.l.b16 %v230
        %v527 = vunpack.c.l.b16 %v231
        %v528 = vunpack.c.l.b16 %v232
        %v529 = vunpack.c.l.b16 %v233
        %v530 = vunpack.c.l.b16 %v234
        %v531 = vunpack.c.l.b16 %v235
        %v532 = vunpack.c.l.b16 %v236
        %v533 = vunpack.c.l.b16 %v237
        %v534 = vunpack.c.l.b16 %v238
        %v535 = vunpack.c.l.b16 %v239
        %v536 = vunpack.c.l.b16 %v240
        %v537 = vunpack.c.l.b16 %v241
        %v538 = vunpack.c.l.b16 %v242
        %v539 = vunpack.c.l.b16 %v243
        %v540 = vunpack.c.l.b16 %v244
        %v541 = vunpack.c.l.b16 %v245
        %v542 = vunpack.c.l.b16 %v246
        %v543 = vunpack.c.l.b16 %v247
        %v544 = vunpack.c.l.b16 %v248
        %v545 = vunpack.c.l.b16 %v249
        %v546 = vunpack.c.l.b16 %v250
        %v547 = vunpack.c.l.b16 %v251
        %v548 = vunpack.c.l.b16 %v252
        %v549 = vunpack.c.l.b16 %v253
        %v550 = vunpack.c.l.b16 %v254
        %v551 = vunpack.c.l.b16 %v255
        %v552 = vunpack.c.l.b16 %v256
        %v553 = vunpack.c.l.b16 %v257
        %v554 = vunpack.c.l.b16 %v258
        %v555 = vunpack.c.l.b16 %v259
        %v556 = vunpack.c.l.b16 %v260
        %v557 = vunpack.c.l.b16 %v261
        %v558 = vunpack.c.l.b16 %v262
        %v559 = vunpack.c.l.b16 %v263
        %v560 = vunpack.c.l.b16 %v264
        %v561 = vunpack.c.l.b16 %v265
        %v562 = vunpack.c.l.b16 %v266
        %v563 = vunpack.c.l.b16 %v267
        %v564 = vunpack.c.l.b16 %v268
        %v565 = vunpack.c.l.b16 %v269
        %v566 = vunpack.c.l.b16 %v270
        %v567 = vunpack.c.l.b16 %v271
        %v568 = vunpack.c.l.b16 %v272
        %v569 = vunpack.c.l.b16 %v273
        %v570 = vunpack.c.l.b16 %v274
        %v571 = vunpack.c.l.b16 %v275
        %v572 = vunpack.c.l.b16 %v276
        %v573 = vunpack.c.l.b16 %v277
        %v574 = vunpack.c.l.b16 %v278
        %v575 = vunpack.c.l.b16 %v279
        %v576 = vunpack.c.l.b16 %v280
        %v577 = vunpack.c.l.b16 %v281
        %v578 = vunpack.c.l.b16 %v282
        %v579 = vunpack.c.l.b16 %v283
        %v580 = vunpack.c.l.b16 %v284
        %v581 = vunpack.c.l.b16 %v285
        %v582 = vunpack.c.l.b16 %v286
        %v583 = vunpack.c.l.b16 %v287
        %v584 = vunpack.c.l.b16 %v288
        %v585 = vunpack.c.l.b16 %v289
        %v586 = vunpack.c.l.b16 %v290
        %v587 = vunpack.c.l.b16 %v291
        %v588 = vunpack.c.l.b16 %v292
        %v589 = vunpack.c.l.b16 %v293
        %v590 = vunpack.c.l.b16 %v294
        %v591 = vunpack.c.l.b16 %v295
        %v592 = vunpack.c.l.b16 %v296
        %v593 = vunpack.c.l.b16 %v297
        %v594 = vunpack.c.l.b16 %v298
        %v595 = vunpack.c.l.b16 %v299
        %v596 = vunpack.c.l.b16 %v300
        %v597 = vunpack.c.l.b16 %v301
        %v598 = vunpack.c.l.b16 %v302
        %v599 = vunpack.c.l.b16 %v303
        %v600 = vunpack.c.l.b16 %v304
        %v601 = vunpack.c.l.b16 %v305
        %v602 = vunpack.c.l.b16 %v306
        %v603 = vunpack.c.l.b16 %v307
        %v604 = vunpack.c.l.b16 %v308
        %v605 = vunpack.c.l.b16 %v309
        %v606 = vunpack.c.l.b16 %v310
        %v607 = vunpack.c.l.b16 %v311
        %v608 = vunpack.c.l.b16 %v312
        %v609 = vunpack.c.l.b16 %v313
        %v610 = vunpack.c.l.b16 %v314
        %v611 = vunpack.c.l.b16 %v315
        %v612 = vunpack.c.l.b16 %v316
        %v613 = vunpack.c.l.b16 %v317
        %v614 = vunpack.c.l.b16 %v318
        %v615 = vunpack.c.l.b16 %v319
        %v616 = vunpack.c.l.b16 %v320
        %v617 = vunpack.c.l.b16 %v321
        %v618 = vunpack.c.l.b16 %v322
        %v619 = vunpack.c.l.b16 %v323
        %v620 = vunpack.c.l.b16 %v324
        %v621 = vunpack.c.l.b16 %v325
        %v622 = vunpack.c.l.b16 %v326
        %v623 = vunpack.c.l.b16 %v327
        %v624 = vpack.c.b16 %v497, %v496
        %v625 = vpack.c.b16 %v499, %v498
        %v626 = vpack.c.b16 %v501, %v500
        %v627 = vpack.c.b16 %v503, %v502
        %v628 = vpack.c.b16 %v505, %v504
        %v629 = vpack.c.b16 %v507, %v506
        %v630 = vpack.c.b16 %v509, %v508
        %v631 = vpack.c.b16 %v511, %v510
        %v632 = vpack.c.b16 %v513, %v512
        %v633 = vpack.c.b16 %v515, %v514
        %v634 = vpack.c.b16 %v517, %v516
        %v635 = vpack.c.b16 %v519, %v518
        %v636 = vpack.c.b16 %v521, %v520
        %v637 = vpack.c.b16 %v523, %v522
        %v638 = vpack.c.b16 %v525, %v524
        %v639 = vpack.c.b16 %v527, %v526
        %v640 = vpack.c.b16 %v529, %v528
        %v641 = vpack.c.b16 %v531, %v530
        %v642 = vpack.c.b16 %v533, %v532
        %v643 = vpack.c.b16 %v535, %v534
        %v644 = vpack.c.b16 %v537, %v536
        %v645 = vpack.c.b16 %v539, %v538
        %v646 = vpack.c.b16 %v541, %v540
        %v647 = vpack.c.b16 %v543, %v542
        %v648 = vpack.c.b16 %v545, %v544
        %v649 = vpack.c.b16 %v547, %v546
        %v650 = vpack.c.b16 %v549, %v548
        %v651 = vpack.c.b16 %v551, %v550
        %v652 = vpack.c.b16 %v553, %v552
        %v653 = vpack.c.b16 %v555, %v554
        %v654 = vpack.c.b16 %v557, %v556
        %v655 = vpack.c.b16 %v559, %v558
        %v656 = vpack.c.b16 %v561, %v560
        %v657 = vpack.c.b16 %v563, %v562
        %v658 = vpack.c.b16 %v565, %v564
        %v659 = vpack.c.b16 %v567, %v566
        %v660 = vpack.c.b16 %v569, %v568
        %v661 = vpack.c.b16 %v571, %v570
        %v662 = vpack.c.b16 %v573, %v572
        %v663 = vpack.c.b16 %v575, %v574
        %v664 = vpack.c.b16 %v577, %v576
        %v665 = vpack.c.b16 %v579, %v578
        %v666 = vpack.c.b16 %v581, %v580
        %v667 = vpack.c.b16 %v583, %v582
        %v668 = vpack.c.b16 %v585, %v584
        %v669 = vpack.c.b16 %v587, %v586
        %v670 = vpack.c.b16 %v589, %v588
        %v671 = vpack.c.b16 %v591, %v590
        %v672 = vpack.c.b16 %v593, %v592
        %v673 = vpack.c.b16 %v595, %v594
        %v674 = vpack.c.b16 %v597, %v596
        %v675 = vpack.c.b16 %v599, %v598
        %v676 = vpack.c.b16 %v601, %v600
        %v677 = vpack.c.b16 %v603, %v602
        %v678 = vpack.c.b16 %v605, %v604
        %v679 = vpack.c.b16 %v607, %v606
        %v680 = vpack.c.b16 %v609, %v608
        %v681 = vpack.c.b16 %v611, %v610
        %v682 = vpack.c.b16 %v613, %v612
        %v683 = vpack.c.b16 %v615, %v614
        %v684 = vpack.c.b16 %v617, %v616
        %v685 = vpack.c.b16 %v619, %v618
        %v686 = vpack.c.b16 %v621, %v620
        %v687 = vpack.c.b16 %v623, %v622
        %752 = vmatprep.subr.bf16.mxu0 0
        %753 = vmatpush1.bf16.msra.mxu0 %v624
        %754 = vmatprep.subr.bf16.mxu0 0
        %755 = vmatpush1.bf16.msra.mxu0 %v625
        %756 = vmatprep.subr.bf16.mxu0 0
        %757 = vmatpush1.bf16.msra.mxu0 %v626
        %758 = vmatprep.subr.bf16.mxu0 0
        %759 = vmatpush1.bf16.msra.mxu0 %v627
        %760 = vmatprep.subr.bf16.mxu0 0
        %761 = vmatpush1.bf16.msra.mxu0 %v628
        %762 = vmatprep.subr.bf16.mxu0 0
        %763 = vmatpush1.bf16.msra.mxu0 %v629
        %764 = vmatprep.subr.bf16.mxu0 0
        %765 = vmatpush1.bf16.msra.mxu0 %v630
        %766 = vmatprep.subr.bf16.mxu0 0
        %767 = vmatpush1.bf16.msra.mxu0 %v631
        %768 = vmatprep.subr.bf16.mxu0 0
        %769 = vmatpush1.bf16.msra.mxu0 %v632
        %770 = vmatprep.subr.bf16.mxu0 0
        %771 = vmatpush1.bf16.msra.mxu0 %v633
        %772 = vmatprep.subr.bf16.mxu0 0
        %773 = vmatpush1.bf16.msra.mxu0 %v634
        %774 = vmatprep.subr.bf16.mxu0 0
        %775 = vmatpush1.bf16.msra.mxu0 %v635
        %776 = vmatprep.subr.bf16.mxu0 0
        %777 = vmatpush1.bf16.msra.mxu0 %v636
        %778 = vmatprep.subr.bf16.mxu0 0
        %779 = vmatpush1.bf16.msra.mxu0 %v637
        %780 = vmatprep.subr.bf16.mxu0 0
        %781 = vmatpush1.bf16.msra.mxu0 %v638
        %782 = vmatprep.subr.bf16.mxu0 0
        %783 = vmatpush1.bf16.msra.mxu0 %v639
        %784 = vmatprep.mubr.bf16.mxu0 %v353
        %785 = vmatmul.mubr.bf16.gmra.mrb[0].mxu0 %v352
        %v786 = vpop.f32.mrb[0].mxu0
        %v787 = vadd.f32 0.0, %v786
        %v788 = vpop.f32.mrb[0].mxu0
        %v789 = vpop.f32.mrb[0].mxu0
        %v790 = vadd.f32 0.0, %v789
        %v791 = vpop.f32.mrb[0].mxu0
        %792 = vdwg.mxu0
        %793 = vmatprep.subr.bf16.mxu0 0
        %794 = vmatpush1.bf16.msra.mxu0 %v640
        %795 = vmatprep.subr.bf16.mxu0 0
        %796 = vmatpush1.bf16.msra.mxu0 %v641
        %797 = vmatprep.subr.bf16.mxu0 0
        %798 = vmatpush1.bf16.msra.mxu0 %v642
        %799 = vmatprep.subr.bf16.mxu0 0
        %800 = vmatpush1.bf16.msra.mxu0 %v643
        %801 = vmatprep.subr.bf16.mxu0 0
        %802 = vmatpush1.bf16.msra.mxu0 %v644
        %803 = vmatprep.subr.bf16.mxu0 0
        %804 = vmatpush1.bf16.msra.mxu0 %v645
        %805 = vmatprep.subr.bf16.mxu0 0
        %806 = vmatpush1.bf16.msra.mxu0 %v646
        %807 = vmatprep.subr.bf16.mxu0 0
        %808 = vmatpush1.bf16.msra.mxu0 %v647
        %809 = vmatprep.subr.bf16.mxu0 0
        %810 = vmatpush1.bf16.msra.mxu0 %v648
        %811 = vmatprep.subr.bf16.mxu0 0
        %812 = vmatpush1.bf16.msra.mxu0 %v649
        %813 = vmatprep.subr.bf16.mxu0 0
        %814 = vmatpush1.bf16.msra.mxu0 %v650
        %815 = vmatprep.subr.bf16.mxu0 0
        %816 = vmatpush1.bf16.msra.mxu0 %v651
        %817 = vmatprep.subr.bf16.mxu0 0
        %818 = vmatpush1.bf16.msra.mxu0 %v652
        %819 = vmatprep.subr.bf16.mxu0 0
        %820 = vmatpush1.bf16.msra.mxu0 %v653
        %821 = vmatprep.subr.bf16.mxu0 0
        %822 = vmatpush1.bf16.msra.mxu0 %v654
        %823 = vmatprep.subr.bf16.mxu0 0
        %824 = vmatpush1.bf16.msra.mxu0 %v655
        %825 = vmatprep.mubr.bf16.mxu0 %v355
        %826 = vmatmul.mubr.bf16.gmra.mrb[0].mxu0 %v354
        %v827 = vpop.f32.mrb[0].mxu0
        %v828 = vadd.f32 %v787, %v827
        %v829 = vpop.f32.mrb[0].mxu0
        %v830 = vpop.f32.mrb[0].mxu0
        %v831 = vadd.f32 %v790, %v830
        %v832 = vpop.f32.mrb[0].mxu0
        %833 = vdwg.mxu0
        %834 = vmatprep.subr.bf16.mxu0 0
        %835 = vmatpush1.bf16.msra.mxu0 %v656
        %836 = vmatprep.subr.bf16.mxu0 0
        %837 = vmatpush1.bf16.msra.mxu0 %v657
        %838 = vmatprep.subr.bf16.mxu0 0
        %839 = vmatpush1.bf16.msra.mxu0 %v658
        %840 = vmatprep.subr.bf16.mxu0 0
        %841 = vmatpush1.bf16.msra.mxu0 %v659
        %842 = vmatprep.subr.bf16.mxu0 0
        %843 = vmatpush1.bf16.msra.mxu0 %v660
        %844 = vmatprep.subr.bf16.mxu0 0
        %845 = vmatpush1.bf16.msra.mxu0 %v661
        %846 = vmatprep.subr.bf16.mxu0 0
        %847 = vmatpush1.bf16.msra.mxu0 %v662
        %848 = vmatprep.subr.bf16.mxu0 0
        %849 = vmatpush1.bf16.msra.mxu0 %v663
        %850 = vmatprep.subr.bf16.mxu0 0
        %851 = vmatpush1.bf16.msra.mxu0 %v664
        %852 = vmatprep.subr.bf16.mxu0 0
        %853 = vmatpush1.bf16.msra.mxu0 %v665
        %854 = vmatprep.subr.bf16.mxu0 0
        %855 = vmatpush1.bf16.msra.mxu0 %v666
        %856 = vmatprep.subr.bf16.mxu0 0
        %857 = vmatpush1.bf16.msra.mxu0 %v667
        %858 = vmatprep.subr.bf16.mxu0 0
        %859 = vmatpush1.bf16.msra.mxu0 %v668
        %860 = vmatprep.subr.bf16.mxu0 0
        %861 = vmatpush1.bf16.msra.mxu0 %v669
        %862 = vmatprep.subr.bf16.mxu0 0
        %863 = vmatpush1.bf16.msra.mxu0 %v670
        %864 = vmatprep.subr.bf16.mxu0 0
        %865 = vmatpush1.bf16.msra.mxu0 %v671
        %866 = vmatprep.mubr.bf16.mxu0 %v357
        %867 = vmatmul.mubr.bf16.gmra.mrb[0].mxu0 %v356
        %v868 = vpop.f32.mrb[0].mxu0
        %v869 = vadd.f32 %v828, %v868
        %v870 = vpop.f32.mrb[0].mxu0
        %v871 = vpop.f32.mrb[0].mxu0
        %v872 = vadd.f32 %v831, %v871
        %v873 = vpop.f32.mrb[0].mxu0
        %874 = vdwg.mxu0
        %875 = vmatprep.subr.bf16.mxu0 0
        %876 = vmatpush1.bf16.msra.mxu0 %v672
        %877 = vmatprep.subr.bf16.mxu0 0
        %878 = vmatpush1.bf16.msra.mxu0 %v673
        %879 = vmatprep.subr.bf16.mxu0 0
        %880 = vmatpush1.bf16.msra.mxu0 %v674
        %881 = vmatprep.subr.bf16.mxu0 0
        %882 = vmatpush1.bf16.msra.mxu0 %v675
        %883 = vmatprep.subr.bf16.mxu0 0
        %884 = vmatpush1.bf16.msra.mxu0 %v676
        %885 = vmatprep.subr.bf16.mxu0 0
        %886 = vmatpush1.bf16.msra.mxu0 %v677
        %887 = vmatprep.subr.bf16.mxu0 0
        %888 = vmatpush1.bf16.msra.mxu0 %v678
        %889 = vmatprep.subr.bf16.mxu0 0
        %890 = vmatpush1.bf16.msra.mxu0 %v679
        %891 = vmatprep.subr.bf16.mxu0 0
        %892 = vmatpush1.bf16.msra.mxu0 %v680
        %893 = vmatprep.subr.bf16.mxu0 0
        %894 = vmatpush1.bf16.msra.mxu0 %v681
        %895 = vmatprep.subr.bf16.mxu0 0
        %896 = vmatpush1.bf16.msra.mxu0 %v682
        %897 = vmatprep.subr.bf16.mxu0 0
        %898 = vmatpush1.bf16.msra.mxu0 %v683
        %899 = vmatprep.subr.bf16.mxu0 0
        %900 = vmatpush1.bf16.msra.mxu0 %v684
        %901 = vmatprep.subr.bf16.mxu0 0
        %902 = vmatpush1.bf16.msra.mxu0 %v685
        %903 = vmatprep.subr.bf16.mxu0 0
        %904 = vmatpush1.bf16.msra.mxu0 %v686
        %905 = vmatprep.subr.bf16.mxu0 0
        %906 = vmatpush1.bf16.msra.mxu0 %v687
        %907 = vmatprep.mubr.bf16.mxu0 %v359
        %908 = vmatmul.mubr.bf16.gmra.mrb[0].mxu0 %v358
        %v909 = vpop.f32.mrb[0].mxu0
        %v910 = vadd.f32 %v869, %v909
        %v911 = vpop.f32.mrb[0].mxu0
        %v912 = vpop.f32.mrb[0].mxu0
        %v913 = vadd.f32 %v872, %v912
        %v914 = vpop.f32.mrb[0].mxu0
        %915 = vdwg.mxu0
        %s916 = sld [smem:[#allocation2]]
        %s917 = sld [smem:[#allocation2 + $0x1]]
        %v918 = vunpack.c.l.bf16 %v192
        %v919 = vunpack.c.h.bf16 %v192
        %v920 = vunpack.c.l.bf16 %v193
        %v921 = vunpack.c.h.bf16 %v193
        %v922 = vunpack.c.l.bf16 %v194
        %v923 = vunpack.c.h.bf16 %v194
        %v924 = vunpack.c.l.bf16 %v195
        %v925 = vunpack.c.h.bf16 %v195
        %v926 = vunpack.c.l.bf16 %v196
        %v927 = vunpack.c.h.bf16 %v196
        %v928 = vunpack.c.l.bf16 %v197
        %v929 = vunpack.c.h.bf16 %v197
        %v930 = vunpack.c.l.bf16 %v198
        %v931 = vunpack.c.h.bf16 %v198
        %v932 = vunpack.c.l.bf16 %v199
        %v933 = vunpack.c.h.bf16 %v199
        %v934 = vand.u32 2147483647, %v918
        %vm935 = vcmp.le.f32.partialorder %v934, 0.7853982
        %vm936 = vcmp.lt.s32.totalorder %v918, 0
        %v937 = vand.u32 %v918, 2139095040
        %v938 = vshrl.u32 %v937, 23
        %v939 = vsub.s32 %v938, 127
        %v940 = vand.u32 2147483647, %v918
        %v941 = vand.u32 %v940, 8388607
        %v942 = vor.u32 %v941, 8388608
        %v943 = vsub.s32 0, %v942
        %v944 = vadd.s32 %v939, 1
        %vm945 = vcmp.gt.s32.totalorder %v944, 0
        %v946 = vsel %vm945, %v944, 0
        %v947 = vshrl.u32 %v946, 5
        %v948 = vand.u32 %v946, 31
        %v949 = vsub.s32 32, %v948
        %v950 = vshrl.u32 683565275, %v949
        %v951 = vshll.u32 683565275, %v948
        %v952 = vshrl.u32 2475754826, %v949
        %v953 = vor.u32 %v951, %v952
        %v954 = vshll.u32 2475754826, %v948
        %v955 = vshrl.u32 2131351028, %v949
        %v956 = vor.u32 %v954, %v955
        %v957 = vshll.u32 2131351028, %v948
        %v958 = vshrl.u32 2102212464, %v949
        %v959 = vor.u32 %v957, %v958
        %v960 = vshll.u32 2102212464, %v948
        %v961 = vshrl.u32 920167782, %v949
        %v962 = vor.u32 %v960, %v961
        %v963 = vshll.u32 920167782, %v948
        %v964 = vshrl.u32 1326507024, %v949
        %v965 = vor.u32 %v963, %v964
        %vm966 = vcmp.lt.s32.totalorder %v947, 1
        %vm967 = vcmp.lt.s32.totalorder %v947, 2
        %vm968 = vcmp.lt.s32.totalorder %v947, 3
        %vm969 = vcmp.lt.s32.totalorder %v947, 4
        %v970 = vsel %vm966, %v950, %v953
        %v971 = vsel %vm969, %v959, 2102212464
        %v972 = vsel %vm968, %v956, %v971
        %v973 = vsel %vm967, %v970, %v972
        %v974 = vsel %vm966, %v953, %v956
        %v975 = vsel %vm969, %v962, 920167782
        %v976 = vsel %vm968, %v959, %v975
        %v977 = vsel %vm967, %v974, %v976
        %v978 = vsel %vm966, %v956, %v959
        %v979 = vsel %vm969, %v965, 1326507024
        %v980 = vsel %vm968, %v962, %v979
        %v981 = vsel %vm967, %v978, %v980
        %v982 = vshll.u32 %v942, 8
        %v983 = vmul.u32.u64.compose %v982, %v981
        %v984 = vextract.low.u32 %v983
        %v985 = vextract.high.u32 %v983
        %v986 = vmul.u32.u64.compose %v982, %v977
        %v987 = vextract.low.u32 %v986
        %v988 = vextract.high.u32 %v986
        %v989 = vmul.u32 %v982, %v973
        %v990 = vadd.s32 %v985, %v987
        %vm991 = vc.u32 %v985, %v987
        %v992 = vadd.s32 %v988, 1
        %v993 = vsel %vm991, %v992, %v988
        %v994 = vadd.s32 %v989, %v993
        %v995 = vadd.s32 %v994, 536870912
        %v996 = vshrl.u32 %v995, 30
        %v997 = vshll.u32 %v996, 30
        %v998 = vsub.s32 %v994, %v997
        %vm999 = vcmp.lt.s32.totalorder %v998, 0
        %v1000 = vsub.s32 0, %v998
        %v1001 = vsel %vm999, %v1000, %v998
        %v1002 = vclz %v1001
        %v1003 = vsub.s32 %v1002, 2
        %vm1004 = vcmp.gt.s32.totalorder 0, %v1003
        %v1005 = vsel %vm1004, 0, %v1003
        %v1006 = vsub.s32 32, %v1005
        %v1007 = vshll.u32 %v998, %v1005
        %v1008 = vshrl.u32 %v990, %v1006
        %v1009 = vor.u32 %v1007, %v1008
        %v1010 = vsub.s32 4294967266, %v1005
        %v1011 = vadd.s32 %v1010, 127
        %v1012 = vshll.u32 %v1011, 23
        %v1013 = vor.u32 4788187, %v1012
        %v1014 = vand.u32 2147483647, %v1013
        %v1016 = vcvt.s32.f32 %v1009
        %v1017 = vmul.f32 %v1016, %v1014
        %v1018 = vxor.u32 %v1017, 2147483648
        %v1019 = vsel %vm936, %v1018, %v1017
        %v1020 = vsub.s32 4, %v996
        %v1021 = vsel %vm936, %v1020, %v996
        %v1022 = vsel %vm935, %v918, %v1019
        %v1023 = vsel %vm935, 0, %v1021
        %v1024 = vcosq.f32.pop %v1022
        %v1025 = vsinq.f32.pop %v1022
        %vm1026 = vweird.f32 %v918
        %v1027 = vadd.s32 %v1023, 3
        %v1028 = vand.u32 %v1027, 3
        %vm1029 = vcmp.lt.s32.totalorder %v1028, 2
        %vm1030 = vcmp.eq.s32.totalorder %v1028, 0
        %v1031 = vxor.u32 %v1025, 2147483648
        %v1032 = vsel %vm1030, %v1024, %v1031
        %vm1033 = vcmp.eq.s32.totalorder %v1028, 2
        %v1034 = vxor.u32 %v1024, 2147483648
        %v1035 = vsel %vm1033, %v1034, %v1025
        %v1036 = vsel %vm1029, %v1032, %v1035
        %v1037 = vsel %vm1026, nan, %v1036
        %v1038 = vand.u32 2147483647, %v919
        %vm1039 = vcmp.le.f32.partialorder %v1038, 0.7853982
        %vm1040 = vcmp.lt.s32.totalorder %v919, 0
        %v1041 = vand.u32 %v919, 2139095040
        %v1042 = vshrl.u32 %v1041, 23
        %v1043 = vsub.s32 %v1042, 127
        %v1044 = vand.u32 2147483647, %v919
        %v1045 = vand.u32 %v1044, 8388607
        %v1046 = vor.u32 %v1045, 8388608
        %v1047 = vsub.s32 0, %v1046
        %v1048 = vadd.s32 %v1043, 1
        %vm1049 = vcmp.gt.s32.totalorder %v1048, 0
        %v1050 = vsel %vm1049, %v1048, 0
        %v1051 = vshrl.u32 %v1050, 5
        %v1052 = vand.u32 %v1050, 31
        %v1053 = vsub.s32 32, %v1052
        %v1054 = vshrl.u32 683565275, %v1053
        %v1055 = vshll.u32 683565275, %v1052
        %v1056 = vshrl.u32 2475754826, %v1053
        %v1057 = vor.u32 %v1055, %v1056
        %v1058 = vshll.u32 2475754826, %v1052
        %v1059 = vshrl.u32 2131351028, %v1053
        %v1060 = vor.u32 %v1058, %v1059
        %v1061 = vshll.u32 2131351028, %v1052
        %v1062 = vshrl.u32 2102212464, %v1053
        %v1063 = vor.u32 %v1061, %v1062
        %v1064 = vshll.u32 2102212464, %v1052
        %v1065 = vshrl.u32 920167782, %v1053
        %v1066 = vor.u32 %v1064, %v1065
        %v1067 = vshll.u32 920167782, %v1052
        %v1068 = vshrl.u32 1326507024, %v1053
        %v1069 = vor.u32 %v1067, %v1068
        %vm1070 = vcmp.lt.s32.totalorder %v1051, 1
        %vm1071 = vcmp.lt.s32.totalorder %v1051, 2
        %vm1072 = vcmp.lt.s32.totalorder %v1051, 3
        %vm1073 = vcmp.lt.s32.totalorder %v1051, 4
        %v1074 = vsel %vm1070, %v1054, %v1057
        %v1075 = vsel %vm1073, %v1063, 2102212464
        %v1076 = vsel %vm1072, %v1060, %v1075
        %v1077 = vsel %vm1071, %v1074, %v1076
        %v1078 = vsel %vm1070, %v1057, %v1060
        %v1079 = vsel %vm1073, %v1066, 920167782
        %v1080 = vsel %vm1072, %v1063, %v1079
        %v1081 = vsel %vm1071, %v1078, %v1080
        %v1082 = vsel %vm1070, %v1060, %v1063
        %v1083 = vsel %vm1073, %v1069, 1326507024
        %v1084 = vsel %vm1072, %v1066, %v1083
        %v1085 = vsel %vm1071, %v1082, %v1084
        %v1086 = vshll.u32 %v1046, 8
        %v1087 = vmul.u32.u64.compose %v1086, %v1085
        %v1088 = vextract.low.u32 %v1087
        %v1089 = vextract.high.u32 %v1087
        %v1090 = vmul.u32.u64.compose %v1086, %v1081
        %v1091 = vextract.low.u32 %v1090
        %v1092 = vextract.high.u32 %v1090
        %v1093 = vmul.u32 %v1086, %v1077
        %v1094 = vadd.s32 %v1089, %v1091
        %vm1095 = vc.u32 %v1089, %v1091
        %v1096 = vadd.s32 %v1092, 1
        %v1097 = vsel %vm1095, %v1096, %v1092
        %v1098 = vadd.s32 %v1093, %v1097
        %v1099 = vadd.s32 %v1098, 536870912
        %v1100 = vshrl.u32 %v1099, 30
        %v1101 = vshll.u32 %v1100, 30
        %v1102 = vsub.s32 %v1098, %v1101
        %vm1103 = vcmp.lt.s32.totalorder %v1102, 0
        %v1104 = vsub.s32 0, %v1102
        %v1105 = vsel %vm1103, %v1104, %v1102
        %v1106 = vclz %v1105
        %v1107 = vsub.s32 %v1106, 2
        %vm1108 = vcmp.gt.s32.totalorder 0, %v1107
        %v1109 = vsel %vm1108, 0, %v1107
        %v1110 = vsub.s32 32, %v1109
        %v1111 = vshll.u32 %v1102, %v1109
        %v1112 = vshrl.u32 %v1094, %v1110
        %v1113 = vor.u32 %v1111, %v1112
        %v1114 = vsub.s32 4294967266, %v1109
        %v1115 = vadd.s32 %v1114, 127
        %v1116 = vshll.u32 %v1115, 23
        %v1117 = vor.u32 4788187, %v1116
        %v1118 = vand.u32 2147483647, %v1117
        %v1120 = vcvt.s32.f32 %v1113
        %v1121 = vmul.f32 %v1120, %v1118
        %v1122 = vxor.u32 %v1121, 2147483648
        %v1123 = vsel %vm1040, %v1122, %v1121
        %v1124 = vsub.s32 4, %v1100
        %v1125 = vsel %vm1040, %v1124, %v1100
        %v1126 = vsel %vm1039, %v919, %v1123
        %v1127 = vsel %vm1039, 0, %v1125
        %v1128 = vcosq.f32.pop %v1126
        %v1129 = vsinq.f32.pop %v1126
        %vm1130 = vweird.f32 %v919
        %v1131 = vadd.s32 %v1127, 3
        %v1132 = vand.u32 %v1131, 3
        %vm1133 = vcmp.lt.s32.totalorder %v1132, 2
        %vm1134 = vcmp.eq.s32.totalorder %v1132, 0
        %v1135 = vxor.u32 %v1129, 2147483648
        %v1136 = vsel %vm1134, %v1128, %v1135
        %vm1137 = vcmp.eq.s32.totalorder %v1132, 2
        %v1138 = vxor.u32 %v1128, 2147483648
        %v1139 = vsel %vm1137, %v1138, %v1129
        %v1140 = vsel %vm1133, %v1136, %v1139
        %v1141 = vsel %vm1130, nan, %v1140
        %v1142 = vand.u32 2147483647, %v920
        %vm1143 = vcmp.le.f32.partialorder %v1142, 0.7853982
        %vm1144 = vcmp.lt.s32.totalorder %v920, 0
        %v1145 = vand.u32 %v920, 2139095040
        %v1146 = vshrl.u32 %v1145, 23
        %v1147 = vsub.s32 %v1146, 127
        %v1148 = vand.u32 2147483647, %v920
        %v1149 = vand.u32 %v1148, 8388607
        %v1150 = vor.u32 %v1149, 8388608
        %v1151 = vsub.s32 0, %v1150
        %v1152 = vadd.s32 %v1147, 1
        %vm1153 = vcmp.gt.s32.totalorder %v1152, 0
        %v1154 = vsel %vm1153, %v1152, 0
        %v1155 = vshrl.u32 %v1154, 5
        %v1156 = vand.u32 %v1154, 31
        %v1157 = vsub.s32 32, %v1156
        %v1158 = vshrl.u32 683565275, %v1157
        %v1159 = vshll.u32 683565275, %v1156
        %v1160 = vshrl.u32 2475754826, %v1157
        %v1161 = vor.u32 %v1159, %v1160
        %v1162 = vshll.u32 2475754826, %v1156
        %v1163 = vshrl.u32 2131351028, %v1157
        %v1164 = vor.u32 %v1162, %v1163
        %v1165 = vshll.u32 2131351028, %v1156
        %v1166 = vshrl.u32 2102212464, %v1157
        %v1167 = vor.u32 %v1165, %v1166
        %v1168 = vshll.u32 2102212464, %v1156
        %v1169 = vshrl.u32 920167782, %v1157
        %v1170 = vor.u32 %v1168, %v1169
        %v1171 = vshll.u32 920167782, %v1156
        %v1172 = vshrl.u32 1326507024, %v1157
        %v1173 = vor.u32 %v1171, %v1172
        %vm1174 = vcmp.lt.s32.totalorder %v1155, 1
        %vm1175 = vcmp.lt.s32.totalorder %v1155, 2
        %vm1176 = vcmp.lt.s32.totalorder %v1155, 3
        %vm1177 = vcmp.lt.s32.totalorder %v1155, 4
        %v1178 = vsel %vm1174, %v1158, %v1161
        %v1179 = vsel %vm1177, %v1167, 2102212464
        %v1180 = vsel %vm1176, %v1164, %v1179
        %v1181 = vsel %vm1175, %v1178, %v1180
        %v1182 = vsel %vm1174, %v1161, %v1164
        %v1183 = vsel %vm1177, %v1170, 920167782
        %v1184 = vsel %vm1176, %v1167, %v1183
        %v1185 = vsel %vm1175, %v1182, %v1184
        %v1186 = vsel %vm1174, %v1164, %v1167
        %v1187 = vsel %vm1177, %v1173, 1326507024
        %v1188 = vsel %vm1176, %v1170, %v1187
        %v1189 = vsel %vm1175, %v1186, %v1188
        %v1190 = vshll.u32 %v1150, 8
        %v1191 = vmul.u32.u64.compose %v1190, %v1189
        %v1192 = vextract.low.u32 %v1191
        %v1193 = vextract.high.u32 %v1191
        %v1194 = vmul.u32.u64.compose %v1190, %v1185
        %v1195 = vextract.low.u32 %v1194
        %v1196 = vextract.high.u32 %v1194
        %v1197 = vmul.u32 %v1190, %v1181
        %v1198 = vadd.s32 %v1193, %v1195
        %vm1199 = vc.u32 %v1193, %v1195
        %v1200 = vadd.s32 %v1196, 1
        %v1201 = vsel %vm1199, %v1200, %v1196
        %v1202 = vadd.s32 %v1197, %v1201
        %v1203 = vadd.s32 %v1202, 536870912
        %v1204 = vshrl.u32 %v1203, 30
        %v1205 = vshll.u32 %v1204, 30
        %v1206 = vsub.s32 %v1202, %v1205
        %vm1207 = vcmp.lt.s32.totalorder %v1206, 0
        %v1208 = vsub.s32 0, %v1206
        %v1209 = vsel %vm1207, %v1208, %v1206
        %v1210 = vclz %v1209
        %v1211 = vsub.s32 %v1210, 2
        %vm1212 = vcmp.gt.s32.totalorder 0, %v1211
        %v1213 = vsel %vm1212, 0, %v1211
        %v1214 = vsub.s32 32, %v1213
        %v1215 = vshll.u32 %v1206, %v1213
        %v1216 = vshrl.u32 %v1198, %v1214
        %v1217 = vor.u32 %v1215, %v1216
        %v1218 = vsub.s32 4294967266, %v1213
        %v1219 = vadd.s32 %v1218, 127
        %v1220 = vshll.u32 %v1219, 23
        %v1221 = vor.u32 4788187, %v1220
        %v1222 = vand.u32 2147483647, %v1221
        %v1224 = vcvt.s32.f32 %v1217
        %v1225 = vmul.f32 %v1224, %v1222
        %v1226 = vxor.u32 %v1225, 2147483648
        %v1227 = vsel %vm1144, %v1226, %v1225
        %v1228 = vsub.s32 4, %v1204
        %v1229 = vsel %vm1144, %v1228, %v1204
        %v1230 = vsel %vm1143, %v920, %v1227
        %v1231 = vsel %vm1143, 0, %v1229
        %v1232 = vcosq.f32.pop %v1230
        %v1233 = vsinq.f32.pop %v1230
        %vm1234 = vweird.f32 %v920
        %v1235 = vadd.s32 %v1231, 3
        %v1236 = vand.u32 %v1235, 3
        %vm1237 = vcmp.lt.s32.totalorder %v1236, 2
        %vm1238 = vcmp.eq.s32.totalorder %v1236, 0
        %v1239 = vxor.u32 %v1233, 2147483648
        %v1240 = vsel %vm1238, %v1232, %v1239
        %vm1241 = vcmp.eq.s32.totalorder %v1236, 2
        %v1242 = vxor.u32 %v1232, 2147483648
        %v1243 = vsel %vm1241, %v1242, %v1233
        %v1244 = vsel %vm1237, %v1240, %v1243
        %v1245 = vsel %vm1234, nan, %v1244
        %v1246 = vand.u32 2147483647, %v921
        %vm1247 = vcmp.le.f32.partialorder %v1246, 0.7853982
        %vm1248 = vcmp.lt.s32.totalorder %v921, 0
        %v1249 = vand.u32 %v921, 2139095040
        %v1250 = vshrl.u32 %v1249, 23
        %v1251 = vsub.s32 %v1250, 127
        %v1252 = vand.u32 2147483647, %v921
        %v1253 = vand.u32 %v1252, 8388607
        %v1254 = vor.u32 %v1253, 8388608
        %v1255 = vsub.s32 0, %v1254
        %v1256 = vadd.s32 %v1251, 1
        %vm1257 = vcmp.gt.s32.totalorder %v1256, 0
        %v1258 = vsel %vm1257, %v1256, 0
        %v1259 = vshrl.u32 %v1258, 5
        %v1260 = vand.u32 %v1258, 31
        %v1261 = vsub.s32 32, %v1260
        %v1262 = vshrl.u32 683565275, %v1261
        %v1263 = vshll.u32 683565275, %v1260
        %v1264 = vshrl.u32 2475754826, %v1261
        %v1265 = vor.u32 %v1263, %v1264
        %v1266 = vshll.u32 2475754826, %v1260
        %v1267 = vshrl.u32 2131351028, %v1261
        %v1268 = vor.u32 %v1266, %v1267
        %v1269 = vshll.u32 2131351028, %v1260
        %v1270 = vshrl.u32 2102212464, %v1261
        %v1271 = vor.u32 %v1269, %v1270
        %v1272 = vshll.u32 2102212464, %v1260
        %v1273 = vshrl.u32 920167782, %v1261
        %v1274 = vor.u32 %v1272, %v1273
        %v1275 = vshll.u32 920167782, %v1260
        %v1276 = vshrl.u32 1326507024, %v1261
        %v1277 = vor.u32 %v1275, %v1276
        %vm1278 = vcmp.lt.s32.totalorder %v1259, 1
        %vm1279 = vcmp.lt.s32.totalorder %v1259, 2
        %vm1280 = vcmp.lt.s32.totalorder %v1259, 3
        %vm1281 = vcmp.lt.s32.totalorder %v1259, 4
        %v1282 = vsel %vm1278, %v1262, %v1265
        %v1283 = vsel %vm1281, %v1271, 2102212464
        %v1284 = vsel %vm1280, %v1268, %v1283
        %v1285 = vsel %vm1279, %v1282, %v1284
        %v1286 = vsel %vm1278, %v1265, %v1268
        %v1287 = vsel %vm1281, %v1274, 920167782
        %v1288 = vsel %vm1280, %v1271, %v1287
        %v1289 = vsel %vm1279, %v1286, %v1288
        %v1290 = vsel %vm1278, %v1268, %v1271
        %v1291 = vsel %vm1281, %v1277, 1326507024
        %v1292 = vsel %vm1280, %v1274, %v1291
        %v1293 = vsel %vm1279, %v1290, %v1292
        %v1294 = vshll.u32 %v1254, 8
        %v1295 = vmul.u32.u64.compose %v1294, %v1293
        %v1296 = vextract.low.u32 %v1295
        %v1297 = vextract.high.u32 %v1295
        %v1298 = vmul.u32.u64.compose %v1294, %v1289
        %v1299 = vextract.low.u32 %v1298
        %v1300 = vextract.high.u32 %v1298
        %v1301 = vmul.u32 %v1294, %v1285
        %v1302 = vadd.s32 %v1297, %v1299
        %vm1303 = vc.u32 %v1297, %v1299
        %v1304 = vadd.s32 %v1300, 1
        %v1305 = vsel %vm1303, %v1304, %v1300
        %v1306 = vadd.s32 %v1301, %v1305
        %v1307 = vadd.s32 %v1306, 536870912
        %v1308 = vshrl.u32 %v1307, 30
        %v1309 = vshll.u32 %v1308, 30
        %v1310 = vsub.s32 %v1306, %v1309
        %vm1311 = vcmp.lt.s32.totalorder %v1310, 0
        %v1312 = vsub.s32 0, %v1310
        %v1313 = vsel %vm1311, %v1312, %v1310
        %v1314 = vclz %v1313
        %v1315 = vsub.s32 %v1314, 2
        %vm1316 = vcmp.gt.s32.totalorder 0, %v1315
        %v1317 = vsel %vm1316, 0, %v1315
        %v1318 = vsub.s32 32, %v1317
        %v1319 = vshll.u32 %v1310, %v1317
        %v1320 = vshrl.u32 %v1302, %v1318
        %v1321 = vor.u32 %v1319, %v1320
        %v1322 = vsub.s32 4294967266, %v1317
        %v1323 = vadd.s32 %v1322, 127
        %v1324 = vshll.u32 %v1323, 23
        %v1325 = vor.u32 4788187, %v1324
        %v1326 = vand.u32 2147483647, %v1325
        %v1328 = vcvt.s32.f32 %v1321
        %v1329 = vmul.f32 %v1328, %v1326
        %v1330 = vxor.u32 %v1329, 2147483648
        %v1331 = vsel %vm1248, %v1330, %v1329
        %v1332 = vsub.s32 4, %v1308
        %v1333 = vsel %vm1248, %v1332, %v1308
        %v1334 = vsel %vm1247, %v921, %v1331
        %v1335 = vsel %vm1247, 0, %v1333
        %v1336 = vcosq.f32.pop %v1334
        %v1337 = vsinq.f32.pop %v1334
        %vm1338 = vweird.f32 %v921
        %v1339 = vadd.s32 %v1335, 3
        %v1340 = vand.u32 %v1339, 3
        %vm1341 = vcmp.lt.s32.totalorder %v1340, 2
        %vm1342 = vcmp.eq.s32.totalorder %v1340, 0
        %v1343 = vxor.u32 %v1337, 2147483648
        %v1344 = vsel %vm1342, %v1336, %v1343
        %vm1345 = vcmp.eq.s32.totalorder %v1340, 2
        %v1346 = vxor.u32 %v1336, 2147483648
        %v1347 = vsel %vm1345, %v1346, %v1337
        %v1348 = vsel %vm1341, %v1344, %v1347
        %v1349 = vsel %vm1338, nan, %v1348
        %v1350 = vand.u32 2147483647, %v922
        %vm1351 = vcmp.le.f32.partialorder %v1350, 0.7853982
        %vm1352 = vcmp.lt.s32.totalorder %v922, 0
        %v1353 = vand.u32 %v922, 2139095040
        %v1354 = vshrl.u32 %v1353, 23
        %v1355 = vsub.s32 %v1354, 127
        %v1356 = vand.u32 2147483647, %v922
        %v1357 = vand.u32 %v1356, 8388607
        %v1358 = vor.u32 %v1357, 8388608
        %v1359 = vsub.s32 0, %v1358
        %v1360 = vadd.s32 %v1355, 1
        %vm1361 = vcmp.gt.s32.totalorder %v1360, 0
        %v1362 = vsel %vm1361, %v1360, 0
        %v1363 = vshrl.u32 %v1362, 5
        %v1364 = vand.u32 %v1362, 31
        %v1365 = vsub.s32 32, %v1364
        %v1366 = vshrl.u32 683565275, %v1365
        %v1367 = vshll.u32 683565275, %v1364
        %v1368 = vshrl.u32 2475754826, %v1365
        %v1369 = vor.u32 %v1367, %v1368
        %v1370 = vshll.u32 2475754826, %v1364
        %v1371 = vshrl.u32 2131351028, %v1365
        %v1372 = vor.u32 %v1370, %v1371
        %v1373 = vshll.u32 2131351028, %v1364
        %v1374 = vshrl.u32 2102212464, %v1365
        %v1375 = vor.u32 %v1373, %v1374
        %v1376 = vshll.u32 2102212464, %v1364
        %v1377 = vshrl.u32 920167782, %v1365
        %v1378 = vor.u32 %v1376, %v1377
        %v1379 = vshll.u32 920167782, %v1364
        %v1380 = vshrl.u32 1326507024, %v1365
        %v1381 = vor.u32 %v1379, %v1380
        %vm1382 = vcmp.lt.s32.totalorder %v1363, 1
        %vm1383 = vcmp.lt.s32.totalorder %v1363, 2
        %vm1384 = vcmp.lt.s32.totalorder %v1363, 3
        %vm1385 = vcmp.lt.s32.totalorder %v1363, 4
        %v1386 = vsel %vm1382, %v1366, %v1369
        %v1387 = vsel %vm1385, %v1375, 2102212464
        %v1388 = vsel %vm1384, %v1372, %v1387
        %v1389 = vsel %vm1383, %v1386, %v1388
        %v1390 = vsel %vm1382, %v1369, %v1372
        %v1391 = vsel %vm1385, %v1378, 920167782
        %v1392 = vsel %vm1384, %v1375, %v1391
        %v1393 = vsel %vm1383, %v1390, %v1392
        %v1394 = vsel %vm1382, %v1372, %v1375
        %v1395 = vsel %vm1385, %v1381, 1326507024
        %v1396 = vsel %vm1384, %v1378, %v1395
        %v1397 = vsel %vm1383, %v1394, %v1396
        %v1398 = vshll.u32 %v1358, 8
        %v1399 = vmul.u32.u64.compose %v1398, %v1397
        %v1400 = vextract.low.u32 %v1399
        %v1401 = vextract.high.u32 %v1399
        %v1402 = vmul.u32.u64.compose %v1398, %v1393
        %v1403 = vextract.low.u32 %v1402
        %v1404 = vextract.high.u32 %v1402
        %v1405 = vmul.u32 %v1398, %v1389
        %v1406 = vadd.s32 %v1401, %v1403
        %vm1407 = vc.u32 %v1401, %v1403
        %v1408 = vadd.s32 %v1404, 1
        %v1409 = vsel %vm1407, %v1408, %v1404
        %v1410 = vadd.s32 %v1405, %v1409
        %v1411 = vadd.s32 %v1410, 536870912
        %v1412 = vshrl.u32 %v1411, 30
        %v1413 = vshll.u32 %v1412, 30
        %v1414 = vsub.s32 %v1410, %v1413
        %vm1415 = vcmp.lt.s32.totalorder %v1414, 0
        %v1416 = vsub.s32 0, %v1414
        %v1417 = vsel %vm1415, %v1416, %v1414
        %v1418 = vclz %v1417
        %v1419 = vsub.s32 %v1418, 2
        %vm1420 = vcmp.gt.s32.totalorder 0, %v1419
        %v1421 = vsel %vm1420, 0, %v1419
        %v1422 = vsub.s32 32, %v1421
        %v1423 = vshll.u32 %v1414, %v1421
        %v1424 = vshrl.u32 %v1406, %v1422
        %v1425 = vor.u32 %v1423, %v1424
        %v1426 = vsub.s32 4294967266, %v1421
        %v1427 = vadd.s32 %v1426, 127
        %v1428 = vshll.u32 %v1427, 23
        %v1429 = vor.u32 4788187, %v1428
        %v1430 = vand.u32 2147483647, %v1429
        %v1432 = vcvt.s32.f32 %v1425
        %v1433 = vmul.f32 %v1432, %v1430
        %v1434 = vxor.u32 %v1433, 2147483648
        %v1435 = vsel %vm1352, %v1434, %v1433
        %v1436 = vsub.s32 4, %v1412
        %v1437 = vsel %vm1352, %v1436, %v1412
        %v1438 = vsel %vm1351, %v922, %v1435
        %v1439 = vsel %vm1351, 0, %v1437
        %v1440 = vcosq.f32.pop %v1438
        %v1441 = vsinq.f32.pop %v1438
        %vm1442 = vweird.f32 %v922
        %v1443 = vadd.s32 %v1439, 3
        %v1444 = vand.u32 %v1443, 3
        %vm1445 = vcmp.lt.s32.totalorder %v1444, 2
        %vm1446 = vcmp.eq.s32.totalorder %v1444, 0
        %v1447 = vxor.u32 %v1441, 2147483648
        %v1448 = vsel %vm1446, %v1440, %v1447
        %vm1449 = vcmp.eq.s32.totalorder %v1444, 2
        %v1450 = vxor.u32 %v1440, 2147483648
        %v1451 = vsel %vm1449, %v1450, %v1441
        %v1452 = vsel %vm1445, %v1448, %v1451
        %v1453 = vsel %vm1442, nan, %v1452
        %v1454 = vand.u32 2147483647, %v923
        %vm1455 = vcmp.le.f32.partialorder %v1454, 0.7853982
        %vm1456 = vcmp.lt.s32.totalorder %v923, 0
        %v1457 = vand.u32 %v923, 2139095040
        %v1458 = vshrl.u32 %v1457, 23
        %v1459 = vsub.s32 %v1458, 127
        %v1460 = vand.u32 2147483647, %v923
        %v1461 = vand.u32 %v1460, 8388607
        %v1462 = vor.u32 %v1461, 8388608
        %v1463 = vsub.s32 0, %v1462
        %v1464 = vadd.s32 %v1459, 1
        %vm1465 = vcmp.gt.s32.totalorder %v1464, 0
        %v1466 = vsel %vm1465, %v1464, 0
        %v1467 = vshrl.u32 %v1466, 5
        %v1468 = vand.u32 %v1466, 31
        %v1469 = vsub.s32 32, %v1468
        %v1470 = vshrl.u32 683565275, %v1469
        %v1471 = vshll.u32 683565275, %v1468
        %v1472 = vshrl.u32 2475754826, %v1469
        %v1473 = vor.u32 %v1471, %v1472
        %v1474 = vshll.u32 2475754826, %v1468
        %v1475 = vshrl.u32 2131351028, %v1469
        %v1476 = vor.u32 %v1474, %v1475
        %v1477 = vshll.u32 2131351028, %v1468
        %v1478 = vshrl.u32 2102212464, %v1469
        %v1479 = vor.u32 %v1477, %v1478
        %v1480 = vshll.u32 2102212464, %v1468
        %v1481 = vshrl.u32 920167782, %v1469
        %v1482 = vor.u32 %v1480, %v1481
        %v1483 = vshll.u32 920167782, %v1468
        %v1484 = vshrl.u32 1326507024, %v1469
        %v1485 = vor.u32 %v1483, %v1484
        %vm1486 = vcmp.lt.s32.totalorder %v1467, 1
        %vm1487 = vcmp.lt.s32.totalorder %v1467, 2
        %vm1488 = vcmp.lt.s32.totalorder %v1467, 3
        %vm1489 = vcmp.lt.s32.totalorder %v1467, 4
        %v1490 = vsel %vm1486, %v1470, %v1473
        %v1491 = vsel %vm1489, %v1479, 2102212464
        %v1492 = vsel %vm1488, %v1476, %v1491
        %v1493 = vsel %vm1487, %v1490, %v1492
        %v1494 = vsel %vm1486, %v1473, %v1476
        %v1495 = vsel %vm1489, %v1482, 920167782
        %v1496 = vsel %vm1488, %v1479, %v1495
        %v1497 = vsel %vm1487, %v1494, %v1496
        %v1498 = vsel %vm1486, %v1476, %v1479
        %v1499 = vsel %vm1489, %v1485, 1326507024
        %v1500 = vsel %vm1488, %v1482, %v1499
        %v1501 = vsel %vm1487, %v1498, %v1500
        %v1502 = vshll.u32 %v1462, 8
        %v1503 = vmul.u32.u64.compose %v1502, %v1501
        %v1504 = vextract.low.u32 %v1503
        %v1505 = vextract.high.u32 %v1503
        %v1506 = vmul.u32.u64.compose %v1502, %v1497
        %v1507 = vextract.low.u32 %v1506
        %v1508 = vextract.high.u32 %v1506
        %v1509 = vmul.u32 %v1502, %v1493
        %v1510 = vadd.s32 %v1505, %v1507
        %vm1511 = vc.u32 %v1505, %v1507
        %v1512 = vadd.s32 %v1508, 1
        %v1513 = vsel %vm1511, %v1512, %v1508
        %v1514 = vadd.s32 %v1509, %v1513
        %v1515 = vadd.s32 %v1514, 536870912
        %v1516 = vshrl.u32 %v1515, 30
        %v1517 = vshll.u32 %v1516, 30
        %v1518 = vsub.s32 %v1514, %v1517
        %vm1519 = vcmp.lt.s32.totalorder %v1518, 0
        %v1520 = vsub.s32 0, %v1518
        %v1521 = vsel %vm1519, %v1520, %v1518
        %v1522 = vclz %v1521
        %v1523 = vsub.s32 %v1522, 2
        %vm1524 = vcmp.gt.s32.totalorder 0, %v1523
        %v1525 = vsel %vm1524, 0, %v1523
        %v1526 = vsub.s32 32, %v1525
        %v1527 = vshll.u32 %v1518, %v1525
        %v1528 = vshrl.u32 %v1510, %v1526
        %v1529 = vor.u32 %v1527, %v1528
        %v1530 = vsub.s32 4294967266, %v1525
        %v1531 = vadd.s32 %v1530, 127
        %v1532 = vshll.u32 %v1531, 23
        %v1533 = vor.u32 4788187, %v1532
        %v1534 = vand.u32 2147483647, %v1533
        %v1536 = vcvt.s32.f32 %v1529
        %v1537 = vmul.f32 %v1536, %v1534
        %v1538 = vxor.u32 %v1537, 2147483648
        %v1539 = vsel %vm1456, %v1538, %v1537
        %v1540 = vsub.s32 4, %v1516
        %v1541 = vsel %vm1456, %v1540, %v1516
        %v1542 = vsel %vm1455, %v923, %v1539
        %v1543 = vsel %vm1455, 0, %v1541
        %v1544 = vcosq.f32.pop %v1542
        %v1545 = vsinq.f32.pop %v1542
        %vm1546 = vweird.f32 %v923
        %v1547 = vadd.s32 %v1543, 3
        %v1548 = vand.u32 %v1547, 3
        %vm1549 = vcmp.lt.s32.totalorder %v1548, 2
        %vm1550 = vcmp.eq.s32.totalorder %v1548, 0
        %v1551 = vxor.u32 %v1545, 2147483648
        %v1552 = vsel %vm1550, %v1544, %v1551
        %vm1553 = vcmp.eq.s32.totalorder %v1548, 2
        %v1554 = vxor.u32 %v1544, 2147483648
        %v1555 = vsel %vm1553, %v1554, %v1545
        %v1556 = vsel %vm1549, %v1552, %v1555
        %v1557 = vsel %vm1546, nan, %v1556
        %v1558 = vand.u32 2147483647, %v924
        %vm1559 = vcmp.le.f32.partialorder %v1558, 0.7853982
        %vm1560 = vcmp.lt.s32.totalorder %v924, 0
        %v1561 = vand.u32 %v924, 2139095040
        %v1562 = vshrl.u32 %v1561, 23
        %v1563 = vsub.s32 %v1562, 127
        %v1564 = vand.u32 2147483647, %v924
        %v1565 = vand.u32 %v1564, 8388607
        %v1566 = vor.u32 %v1565, 8388608
        %v1567 = vsub.s32 0, %v1566
        %v1568 = vadd.s32 %v1563, 1
        %vm1569 = vcmp.gt.s32.totalorder %v1568, 0
        %v1570 = vsel %vm1569, %v1568, 0
        %v1571 = vshrl.u32 %v1570, 5
        %v1572 = vand.u32 %v1570, 31
        %v1573 = vsub.s32 32, %v1572
        %v1574 = vshrl.u32 683565275, %v1573
        %v1575 = vshll.u32 683565275, %v1572
        %v1576 = vshrl.u32 2475754826, %v1573
        %v1577 = vor.u32 %v1575, %v1576
        %v1578 = vshll.u32 2475754826, %v1572
        %v1579 = vshrl.u32 2131351028, %v1573
        %v1580 = vor.u32 %v1578, %v1579
        %v1581 = vshll.u32 2131351028, %v1572
        %v1582 = vshrl.u32 2102212464, %v1573
        %v1583 = vor.u32 %v1581, %v1582
        %v1584 = vshll.u32 2102212464, %v1572
        %v1585 = vshrl.u32 920167782, %v1573
        %v1586 = vor.u32 %v1584, %v1585
        %v1587 = vshll.u32 920167782, %v1572
        %v1588 = vshrl.u32 1326507024, %v1573
        %v1589 = vor.u32 %v1587, %v1588
        %vm1590 = vcmp.lt.s32.totalorder %v1571, 1
        %vm1591 = vcmp.lt.s32.totalorder %v1571, 2
        %vm1592 = vcmp.lt.s32.totalorder %v1571, 3
        %vm1593 = vcmp.lt.s32.totalorder %v1571, 4
        %v1594 = vsel %vm1590, %v1574, %v1577
        %v1595 = vsel %vm1593, %v1583, 2102212464
        %v1596 = vsel %vm1592, %v1580, %v1595
        %v1597 = vsel %vm1591, %v1594, %v1596
        %v1598 = vsel %vm1590, %v1577, %v1580
        %v1599 = vsel %vm1593, %v1586, 920167782
        %v1600 = vsel %vm1592, %v1583, %v1599
        %v1601 = vsel %vm1591, %v1598, %v1600
        %v1602 = vsel %vm1590, %v1580, %v1583
        %v1603 = vsel %vm1593, %v1589, 1326507024
        %v1604 = vsel %vm1592, %v1586, %v1603
        %v1605 = vsel %vm1591, %v1602, %v1604
        %v1606 = vshll.u32 %v1566, 8
        %v1607 = vmul.u32.u64.compose %v1606, %v1605
        %v1608 = vextract.low.u32 %v1607
        %v1609 = vextract.high.u32 %v1607
        %v1610 = vmul.u32.u64.compose %v1606, %v1601
        %v1611 = vextract.low.u32 %v1610
        %v1612 = vextract.high.u32 %v1610
        %v1613 = vmul.u32 %v1606, %v1597
        %v1614 = vadd.s32 %v1609, %v1611
        %vm1615 = vc.u32 %v1609, %v1611
        %v1616 = vadd.s32 %v1612, 1
        %v1617 = vsel %vm1615, %v1616, %v1612
        %v1618 = vadd.s32 %v1613, %v1617
        %v1619 = vadd.s32 %v1618, 536870912
        %v1620 = vshrl.u32 %v1619, 30
        %v1621 = vshll.u32 %v1620, 30
        %v1622 = vsub.s32 %v1618, %v1621
        %vm1623 = vcmp.lt.s32.totalorder %v1622, 0
        %v1624 = vsub.s32 0, %v1622
        %v1625 = vsel %vm1623, %v1624, %v1622
        %v1626 = vclz %v1625
        %v1627 = vsub.s32 %v1626, 2
        %vm1628 = vcmp.gt.s32.totalorder 0, %v1627
        %v1629 = vsel %vm1628, 0, %v1627
        %v1630 = vsub.s32 32, %v1629
        %v1631 = vshll.u32 %v1622, %v1629
        %v1632 = vshrl.u32 %v1614, %v1630
        %v1633 = vor.u32 %v1631, %v1632
        %v1634 = vsub.s32 4294967266, %v1629
        %v1635 = vadd.s32 %v1634, 127
        %v1636 = vshll.u32 %v1635, 23
        %v1637 = vor.u32 4788187, %v1636
        %v1638 = vand.u32 2147483647, %v1637
        %v1640 = vcvt.s32.f32 %v1633
        %v1641 = vmul.f32 %v1640, %v1638
        %v1642 = vxor.u32 %v1641, 2147483648
        %v1643 = vsel %vm1560, %v1642, %v1641
        %v1644 = vsub.s32 4, %v1620
        %v1645 = vsel %vm1560, %v1644, %v1620
        %v1646 = vsel %vm1559, %v924, %v1643
        %v1647 = vsel %vm1559, 0, %v1645
        %v1648 = vcosq.f32.pop %v1646
        %v1649 = vsinq.f32.pop %v1646
        %vm1650 = vweird.f32 %v924
        %v1651 = vadd.s32 %v1647, 3
        %v1652 = vand.u32 %v1651, 3
        %vm1653 = vcmp.lt.s32.totalorder %v1652, 2
        %vm1654 = vcmp.eq.s32.totalorder %v1652, 0
        %v1655 = vxor.u32 %v1649, 2147483648
        %v1656 = vsel %vm1654, %v1648, %v1655
        %vm1657 = vcmp.eq.s32.totalorder %v1652, 2
        %v1658 = vxor.u32 %v1648, 2147483648
        %v1659 = vsel %vm1657, %v1658, %v1649
        %v1660 = vsel %vm1653, %v1656, %v1659
        %v1661 = vsel %vm1650, nan, %v1660
        %v1662 = vand.u32 2147483647, %v925
        %vm1663 = vcmp.le.f32.partialorder %v1662, 0.7853982
        %vm1664 = vcmp.lt.s32.totalorder %v925, 0
        %v1665 = vand.u32 %v925, 2139095040
        %v1666 = vshrl.u32 %v1665, 23
        %v1667 = vsub.s32 %v1666, 127
        %v1668 = vand.u32 2147483647, %v925
        %v1669 = vand.u32 %v1668, 8388607
        %v1670 = vor.u32 %v1669, 8388608
        %v1671 = vsub.s32 0, %v1670
        %v1672 = vadd.s32 %v1667, 1
        %vm1673 = vcmp.gt.s32.totalorder %v1672, 0
        %v1674 = vsel %vm1673, %v1672, 0
        %v1675 = vshrl.u32 %v1674, 5
        %v1676 = vand.u32 %v1674, 31
        %v1677 = vsub.s32 32, %v1676
        %v1678 = vshrl.u32 683565275, %v1677
        %v1679 = vshll.u32 683565275, %v1676
        %v1680 = vshrl.u32 2475754826, %v1677
        %v1681 = vor.u32 %v1679, %v1680
        %v1682 = vshll.u32 2475754826, %v1676
        %v1683 = vshrl.u32 2131351028, %v1677
        %v1684 = vor.u32 %v1682, %v1683
        %v1685 = vshll.u32 2131351028, %v1676
        %v1686 = vshrl.u32 2102212464, %v1677
        %v1687 = vor.u32 %v1685, %v1686
        %v1688 = vshll.u32 2102212464, %v1676
        %v1689 = vshrl.u32 920167782, %v1677
        %v1690 = vor.u32 %v1688, %v1689
        %v1691 = vshll.u32 920167782, %v1676
        %v1692 = vshrl.u32 1326507024, %v1677
        %v1693 = vor.u32 %v1691, %v1692
        %vm1694 = vcmp.lt.s32.totalorder %v1675, 1
        %vm1695 = vcmp.lt.s32.totalorder %v1675, 2
        %vm1696 = vcmp.lt.s32.totalorder %v1675, 3
        %vm1697 = vcmp.lt.s32.totalorder %v1675, 4
        %v1698 = vsel %vm1694, %v1678, %v1681
        %v1699 = vsel %vm1697, %v1687, 2102212464
        %v1700 = vsel %vm1696, %v1684, %v1699
        %v1701 = vsel %vm1695, %v1698, %v1700
        %v1702 = vsel %vm1694, %v1681, %v1684
        %v1703 = vsel %vm1697, %v1690, 920167782
        %v1704 = vsel %vm1696, %v1687, %v1703
        %v1705 = vsel %vm1695, %v1702, %v1704
        %v1706 = vsel %vm1694, %v1684, %v1687
        %v1707 = vsel %vm1697, %v1693, 1326507024
        %v1708 = vsel %vm1696, %v1690, %v1707
        %v1709 = vsel %vm1695, %v1706, %v1708
        %v1710 = vshll.u32 %v1670, 8
        %v1711 = vmul.u32.u64.compose %v1710, %v1709
        %v1712 = vextract.low.u32 %v1711
        %v1713 = vextract.high.u32 %v1711
        %v1714 = vmul.u32.u64.compose %v1710, %v1705
        %v1715 = vextract.low.u32 %v1714
        %v1716 = vextract.high.u32 %v1714
        %v1717 = vmul.u32 %v1710, %v1701
        %v1718 = vadd.s32 %v1713, %v1715
        %vm1719 = vc.u32 %v1713, %v1715
        %v1720 = vadd.s32 %v1716, 1
        %v1721 = vsel %vm1719, %v1720, %v1716
        %v1722 = vadd.s32 %v1717, %v1721
        %v1723 = vadd.s32 %v1722, 536870912
        %v1724 = vshrl.u32 %v1723, 30
        %v1725 = vshll.u32 %v1724, 30
        %v1726 = vsub.s32 %v1722, %v1725
        %vm1727 = vcmp.lt.s32.totalorder %v1726, 0
        %v1728 = vsub.s32 0, %v1726
        %v1729 = vsel %vm1727, %v1728, %v1726
        %v1730 = vclz %v1729
        %v1731 = vsub.s32 %v1730, 2
        %vm1732 = vcmp.gt.s32.totalorder 0, %v1731
        %v1733 = vsel %vm1732, 0, %v1731
        %v1734 = vsub.s32 32, %v1733
        %v1735 = vshll.u32 %v1726, %v1733
        %v1736 = vshrl.u32 %v1718, %v1734
        %v1737 = vor.u32 %v1735, %v1736
        %v1738 = vsub.s32 4294967266, %v1733
        %v1739 = vadd.s32 %v1738, 127
        %v1740 = vshll.u32 %v1739, 23
        %v1741 = vor.u32 4788187, %v1740
        %v1742 = vand.u32 2147483647, %v1741
        %v1744 = vcvt.s32.f32 %v1737
        %v1745 = vmul.f32 %v1744, %v1742
        %v1746 = vxor.u32 %v1745, 2147483648
        %v1747 = vsel %vm1664, %v1746, %v1745
        %v1748 = vsub.s32 4, %v1724
        %v1749 = vsel %vm1664, %v1748, %v1724
        %v1750 = vsel %vm1663, %v925, %v1747
        %v1751 = vsel %vm1663, 0, %v1749
        %v1752 = vcosq.f32.pop %v1750
        %v1753 = vsinq.f32.pop %v1750
        %vm1754 = vweird.f32 %v925
        %v1755 = vadd.s32 %v1751, 3
        %v1756 = vand.u32 %v1755, 3
        %vm1757 = vcmp.lt.s32.totalorder %v1756, 2
        %vm1758 = vcmp.eq.s32.totalorder %v1756, 0
        %v1759 = vxor.u32 %v1753, 2147483648
        %v1760 = vsel %vm1758, %v1752, %v1759
        %vm1761 = vcmp.eq.s32.totalorder %v1756, 2
        %v1762 = vxor.u32 %v1752, 2147483648
        %v1763 = vsel %vm1761, %v1762, %v1753
        %v1764 = vsel %vm1757, %v1760, %v1763
        %v1765 = vsel %vm1754, nan, %v1764
        %v1766 = vand.u32 2147483647, %v926
        %vm1767 = vcmp.le.f32.partialorder %v1766, 0.7853982
        %vm1768 = vcmp.lt.s32.totalorder %v926, 0
        %v1769 = vand.u32 %v926, 2139095040
        %v1770 = vshrl.u32 %v1769, 23
        %v1771 = vsub.s32 %v1770, 127
        %v1772 = vand.u32 2147483647, %v926
        %v1773 = vand.u32 %v1772, 8388607
        %v1774 = vor.u32 %v1773, 8388608
        %v1775 = vsub.s32 0, %v1774
        %v1776 = vadd.s32 %v1771, 1
        %vm1777 = vcmp.gt.s32.totalorder %v1776, 0
        %v1778 = vsel %vm1777, %v1776, 0
        %v1779 = vshrl.u32 %v1778, 5
        %v1780 = vand.u32 %v1778, 31
        %v1781 = vsub.s32 32, %v1780
        %v1782 = vshrl.u32 683565275, %v1781
        %v1783 = vshll.u32 683565275, %v1780
        %v1784 = vshrl.u32 2475754826, %v1781
        %v1785 = vor.u32 %v1783, %v1784
        %v1786 = vshll.u32 2475754826, %v1780
        %v1787 = vshrl.u32 2131351028, %v1781
        %v1788 = vor.u32 %v1786, %v1787
        %v1789 = vshll.u32 2131351028, %v1780
        %v1790 = vshrl.u32 2102212464, %v1781
        %v1791 = vor.u32 %v1789, %v1790
        %v1792 = vshll.u32 2102212464, %v1780
        %v1793 = vshrl.u32 920167782, %v1781
        %v1794 = vor.u32 %v1792, %v1793
        %v1795 = vshll.u32 920167782, %v1780
        %v1796 = vshrl.u32 1326507024, %v1781
        %v1797 = vor.u32 %v1795, %v1796
        %vm1798 = vcmp.lt.s32.totalorder %v1779, 1
        %vm1799 = vcmp.lt.s32.totalorder %v1779, 2
        %vm1800 = vcmp.lt.s32.totalorder %v1779, 3
        %vm1801 = vcmp.lt.s32.totalorder %v1779, 4
        %v1802 = vsel %vm1798, %v1782, %v1785
        %v1803 = vsel %vm1801, %v1791, 2102212464
        %v1804 = vsel %vm1800, %v1788, %v1803
        %v1805 = vsel %vm1799, %v1802, %v1804
        %v1806 = vsel %vm1798, %v1785, %v1788
        %v1807 = vsel %vm1801, %v1794, 920167782
        %v1808 = vsel %vm1800, %v1791, %v1807
        %v1809 = vsel %vm1799, %v1806, %v1808
        %v1810 = vsel %vm1798, %v1788, %v1791
        %v1811 = vsel %vm1801, %v1797, 1326507024
        %v1812 = vsel %vm1800, %v1794, %v1811
        %v1813 = vsel %vm1799, %v1810, %v1812
        %v1814 = vshll.u32 %v1774, 8
        %v1815 = vmul.u32.u64.compose %v1814, %v1813
        %v1816 = vextract.low.u32 %v1815
        %v1817 = vextract.high.u32 %v1815
        %v1818 = vmul.u32.u64.compose %v1814, %v1809
        %v1819 = vextract.low.u32 %v1818
        %v1820 = vextract.high.u32 %v1818
        %v1821 = vmul.u32 %v1814, %v1805
        %v1822 = vadd.s32 %v1817, %v1819
        %vm1823 = vc.u32 %v1817, %v1819
        %v1824 = vadd.s32 %v1820, 1
        %v1825 = vsel %vm1823, %v1824, %v1820
        %v1826 = vadd.s32 %v1821, %v1825
        %v1827 = vadd.s32 %v1826, 536870912
        %v1828 = vshrl.u32 %v1827, 30
        %v1829 = vshll.u32 %v1828, 30
        %v1830 = vsub.s32 %v1826, %v1829
        %vm1831 = vcmp.lt.s32.totalorder %v1830, 0
        %v1832 = vsub.s32 0, %v1830
        %v1833 = vsel %vm1831, %v1832, %v1830
        %v1834 = vclz %v1833
        %v1835 = vsub.s32 %v1834, 2
        %vm1836 = vcmp.gt.s32.totalorder 0, %v1835
        %v1837 = vsel %vm1836, 0, %v1835
        %v1838 = vsub.s32 32, %v1837
        %v1839 = vshll.u32 %v1830, %v1837
        %v1840 = vshrl.u32 %v1822, %v1838
        %v1841 = vor.u32 %v1839, %v1840
        %v1842 = vsub.s32 4294967266, %v1837
        %v1843 = vadd.s32 %v1842, 127
        %v1844 = vshll.u32 %v1843, 23
        %v1845 = vor.u32 4788187, %v1844
        %v1846 = vand.u32 2147483647, %v1845
        %v1848 = vcvt.s32.f32 %v1841
        %v1849 = vmul.f32 %v1848, %v1846
        %v1850 = vxor.u32 %v1849, 2147483648
        %v1851 = vsel %vm1768, %v1850, %v1849
        %v1852 = vsub.s32 4, %v1828
        %v1853 = vsel %vm1768, %v1852, %v1828
        %v1854 = vsel %vm1767, %v926, %v1851
        %v1855 = vsel %vm1767, 0, %v1853
        %v1856 = vcosq.f32.pop %v1854
        %v1857 = vsinq.f32.pop %v1854
        %vm1858 = vweird.f32 %v926
        %v1859 = vadd.s32 %v1855, 3
        %v1860 = vand.u32 %v1859, 3
        %vm1861 = vcmp.lt.s32.totalorder %v1860, 2
        %vm1862 = vcmp.eq.s32.totalorder %v1860, 0
        %v1863 = vxor.u32 %v1857, 2147483648
        %v1864 = vsel %vm1862, %v1856, %v1863
        %vm1865 = vcmp.eq.s32.totalorder %v1860, 2
        %v1866 = vxor.u32 %v1856, 2147483648
        %v1867 = vsel %vm1865, %v1866, %v1857
        %v1868 = vsel %vm1861, %v1864, %v1867
        %v1869 = vsel %vm1858, nan, %v1868
        %v1870 = vand.u32 2147483647, %v927
        %vm1871 = vcmp.le.f32.partialorder %v1870, 0.7853982
        %vm1872 = vcmp.lt.s32.totalorder %v927, 0
        %v1873 = vand.u32 %v927, 2139095040
        %v1874 = vshrl.u32 %v1873, 23
        %v1875 = vsub.s32 %v1874, 127
        %v1876 = vand.u32 2147483647, %v927
        %v1877 = vand.u32 %v1876, 8388607
        %v1878 = vor.u32 %v1877, 8388608
        %v1879 = vsub.s32 0, %v1878
        %v1880 = vadd.s32 %v1875, 1
        %vm1881 = vcmp.gt.s32.totalorder %v1880, 0
        %v1882 = vsel %vm1881, %v1880, 0
        %v1883 = vshrl.u32 %v1882, 5
        %v1884 = vand.u32 %v1882, 31
        %v1885 = vsub.s32 32, %v1884
        %v1886 = vshrl.u32 683565275, %v1885
        %v1887 = vshll.u32 683565275, %v1884
        %v1888 = vshrl.u32 2475754826, %v1885
        %v1889 = vor.u32 %v1887, %v1888
        %v1890 = vshll.u32 2475754826, %v1884
        %v1891 = vshrl.u32 2131351028, %v1885
        %v1892 = vor.u32 %v1890, %v1891
        %v1893 = vshll.u32 2131351028, %v1884
        %v1894 = vshrl.u32 2102212464, %v1885
        %v1895 = vor.u32 %v1893, %v1894
        %v1896 = vshll.u32 2102212464, %v1884
        %v1897 = vshrl.u32 920167782, %v1885
        %v1898 = vor.u32 %v1896, %v1897
        %v1899 = vshll.u32 920167782, %v1884
        %v1900 = vshrl.u32 1326507024, %v1885
        %v1901 = vor.u32 %v1899, %v1900
        %vm1902 = vcmp.lt.s32.totalorder %v1883, 1
        %vm1903 = vcmp.lt.s32.totalorder %v1883, 2
        %vm1904 = vcmp.lt.s32.totalorder %v1883, 3
        %vm1905 = vcmp.lt.s32.totalorder %v1883, 4
        %v1906 = vsel %vm1902, %v1886, %v1889
        %v1907 = vsel %vm1905, %v1895, 2102212464
        %v1908 = vsel %vm1904, %v1892, %v1907
        %v1909 = vsel %vm1903, %v1906, %v1908
        %v1910 = vsel %vm1902, %v1889, %v1892
        %v1911 = vsel %vm1905, %v1898, 920167782
        %v1912 = vsel %vm1904, %v1895, %v1911
        %v1913 = vsel %vm1903, %v1910, %v1912
        %v1914 = vsel %vm1902, %v1892, %v1895
        %v1915 = vsel %vm1905, %v1901, 1326507024
        %v1916 = vsel %vm1904, %v1898, %v1915
        %v1917 = vsel %vm1903, %v1914, %v1916
        %v1918 = vshll.u32 %v1878, 8
        %v1919 = vmul.u32.u64.compose %v1918, %v1917
        %v1920 = vextract.low.u32 %v1919
        %v1921 = vextract.high.u32 %v1919
        %v1922 = vmul.u32.u64.compose %v1918, %v1913
        %v1923 = vextract.low.u32 %v1922
        %v1924 = vextract.high.u32 %v1922
        %v1925 = vmul.u32 %v1918, %v1909
        %v1926 = vadd.s32 %v1921, %v1923
        %vm1927 = vc.u32 %v1921, %v1923
        %v1928 = vadd.s32 %v1924, 1
        %v1929 = vsel %vm1927, %v1928, %v1924
        %v1930 = vadd.s32 %v1925, %v1929
        %v1931 = vadd.s32 %v1930, 536870912
        %v1932 = vshrl.u32 %v1931, 30
        %v1933 = vshll.u32 %v1932, 30
        %v1934 = vsub.s32 %v1930, %v1933
        %vm1935 = vcmp.lt.s32.totalorder %v1934, 0
        %v1936 = vsub.s32 0, %v1934
        %v1937 = vsel %vm1935, %v1936, %v1934
        %v1938 = vclz %v1937
        %v1939 = vsub.s32 %v1938, 2
        %vm1940 = vcmp.gt.s32.totalorder 0, %v1939
        %v1941 = vsel %vm1940, 0, %v1939
        %v1942 = vsub.s32 32, %v1941
        %v1943 = vshll.u32 %v1934, %v1941
        %v1944 = vshrl.u32 %v1926, %v1942
        %v1945 = vor.u32 %v1943, %v1944
        %v1946 = vsub.s32 4294967266, %v1941
        %v1947 = vadd.s32 %v1946, 127
        %v1948 = vshll.u32 %v1947, 23
        %v1949 = vor.u32 4788187, %v1948
        %v1950 = vand.u32 2147483647, %v1949
        %v1952 = vcvt.s32.f32 %v1945
        %v1953 = vmul.f32 %v1952, %v1950
        %v1954 = vxor.u32 %v1953, 2147483648
        %v1955 = vsel %vm1872, %v1954, %v1953
        %v1956 = vsub.s32 4, %v1932
        %v1957 = vsel %vm1872, %v1956, %v1932
        %v1958 = vsel %vm1871, %v927, %v1955
        %v1959 = vsel %vm1871, 0, %v1957
        %v1960 = vcosq.f32.pop %v1958
        %v1961 = vsinq.f32.pop %v1958
        %vm1962 = vweird.f32 %v927
        %v1963 = vadd.s32 %v1959, 3
        %v1964 = vand.u32 %v1963, 3
        %vm1965 = vcmp.lt.s32.totalorder %v1964, 2
        %vm1966 = vcmp.eq.s32.totalorder %v1964, 0
        %v1967 = vxor.u32 %v1961, 2147483648
        %v1968 = vsel %vm1966, %v1960, %v1967
        %vm1969 = vcmp.eq.s32.totalorder %v1964, 2
        %v1970 = vxor.u32 %v1960, 2147483648
        %v1971 = vsel %vm1969, %v1970, %v1961
        %v1972 = vsel %vm1965, %v1968, %v1971
        %v1973 = vsel %vm1962, nan, %v1972
        %v1974 = vand.u32 2147483647, %v928
        %vm1975 = vcmp.le.f32.partialorder %v1974, 0.7853982
        %vm1976 = vcmp.lt.s32.totalorder %v928, 0
        %v1977 = vand.u32 %v928, 2139095040
        %v1978 = vshrl.u32 %v1977, 23
        %v1979 = vsub.s32 %v1978, 127
        %v1980 = vand.u32 2147483647, %v928
        %v1981 = vand.u32 %v1980, 8388607
        %v1982 = vor.u32 %v1981, 8388608
        %v1983 = vsub.s32 0, %v1982
        %v1984 = vadd.s32 %v1979, 1
        %vm1985 = vcmp.gt.s32.totalorder %v1984, 0
        %v1986 = vsel %vm1985, %v1984, 0
        %v1987 = vshrl.u32 %v1986, 5
        %v1988 = vand.u32 %v1986, 31
        %v1989 = vsub.s32 32, %v1988
        %v1990 = vshrl.u32 683565275, %v1989
        %v1991 = vshll.u32 683565275, %v1988
        %v1992 = vshrl.u32 2475754826, %v1989
        %v1993 = vor.u32 %v1991, %v1992
        %v1994 = vshll.u32 2475754826, %v1988
        %v1995 = vshrl.u32 2131351028, %v1989
        %v1996 = vor.u32 %v1994, %v1995
        %v1997 = vshll.u32 2131351028, %v1988
        %v1998 = vshrl.u32 2102212464, %v1989
        %v1999 = vor.u32 %v1997, %v1998
        %v2000 = vshll.u32 2102212464, %v1988
        %v2001 = vshrl.u32 920167782, %v1989
        %v2002 = vor.u32 %v2000, %v2001
        %v2003 = vshll.u32 920167782, %v1988
        %v2004 = vshrl.u32 1326507024, %v1989
        %v2005 = vor.u32 %v2003, %v2004
        %vm2006 = vcmp.lt.s32.totalorder %v1987, 1
        %vm2007 = vcmp.lt.s32.totalorder %v1987, 2
        %vm2008 = vcmp.lt.s32.totalorder %v1987, 3
        %vm2009 = vcmp.lt.s32.totalorder %v1987, 4
        %v2010 = vsel %vm2006, %v1990, %v1993
        %v2011 = vsel %vm2009, %v1999, 2102212464
        %v2012 = vsel %vm2008, %v1996, %v2011
        %v2013 = vsel %vm2007, %v2010, %v2012
        %v2014 = vsel %vm2006, %v1993, %v1996
        %v2015 = vsel %vm2009, %v2002, 920167782
        %v2016 = vsel %vm2008, %v1999, %v2015
        %v2017 = vsel %vm2007, %v2014, %v2016
        %v2018 = vsel %vm2006, %v1996, %v1999
        %v2019 = vsel %vm2009, %v2005, 1326507024
        %v2020 = vsel %vm2008, %v2002, %v2019
        %v2021 = vsel %vm2007, %v2018, %v2020
        %v2022 = vshll.u32 %v1982, 8
        %v2023 = vmul.u32.u64.compose %v2022, %v2021
        %v2024 = vextract.low.u32 %v2023
        %v2025 = vextract.high.u32 %v2023
        %v2026 = vmul.u32.u64.compose %v2022, %v2017
        %v2027 = vextract.low.u32 %v2026
        %v2028 = vextract.high.u32 %v2026
        %v2029 = vmul.u32 %v2022, %v2013
        %v2030 = vadd.s32 %v2025, %v2027
        %vm2031 = vc.u32 %v2025, %v2027
        %v2032 = vadd.s32 %v2028, 1
        %v2033 = vsel %vm2031, %v2032, %v2028
        %v2034 = vadd.s32 %v2029, %v2033
        %v2035 = vadd.s32 %v2034, 536870912
        %v2036 = vshrl.u32 %v2035, 30
        %v2037 = vshll.u32 %v2036, 30
        %v2038 = vsub.s32 %v2034, %v2037
        %vm2039 = vcmp.lt.s32.totalorder %v2038, 0
        %v2040 = vsub.s32 0, %v2038
        %v2041 = vsel %vm2039, %v2040, %v2038
        %v2042 = vclz %v2041
        %v2043 = vsub.s32 %v2042, 2
        %vm2044 = vcmp.gt.s32.totalorder 0, %v2043
        %v2045 = vsel %vm2044, 0, %v2043
        %v2046 = vsub.s32 32, %v2045
        %v2047 = vshll.u32 %v2038, %v2045
        %v2048 = vshrl.u32 %v2030, %v2046
        %v2049 = vor.u32 %v2047, %v2048
        %v2050 = vsub.s32 4294967266, %v2045
        %v2051 = vadd.s32 %v2050, 127
        %v2052 = vshll.u32 %v2051, 23
        %v2053 = vor.u32 4788187, %v2052
        %v2054 = vand.u32 2147483647, %v2053
        %v2056 = vcvt.s32.f32 %v2049
        %v2057 = vmul.f32 %v2056, %v2054
        %v2058 = vxor.u32 %v2057, 2147483648
        %v2059 = vsel %vm1976, %v2058, %v2057
        %v2060 = vsub.s32 4, %v2036
        %v2061 = vsel %vm1976, %v2060, %v2036
        %v2062 = vsel %vm1975, %v928, %v2059
        %v2063 = vsel %vm1975, 0, %v2061
        %v2064 = vcosq.f32.pop %v2062
        %v2065 = vsinq.f32.pop %v2062
        %vm2066 = vweird.f32 %v928
        %v2067 = vadd.s32 %v2063, 3
        %v2068 = vand.u32 %v2067, 3
        %vm2069 = vcmp.lt.s32.totalorder %v2068, 2
        %vm2070 = vcmp.eq.s32.totalorder %v2068, 0
        %v2071 = vxor.u32 %v2065, 2147483648
        %v2072 = vsel %vm2070, %v2064, %v2071
        %vm2073 = vcmp.eq.s32.totalorder %v2068, 2
        %v2074 = vxor.u32 %v2064, 2147483648
        %v2075 = vsel %vm2073, %v2074, %v2065
        %v2076 = vsel %vm2069, %v2072, %v2075
        %v2077 = vsel %vm2066, nan, %v2076
        %v2078 = vand.u32 2147483647, %v929
        %vm2079 = vcmp.le.f32.partialorder %v2078, 0.7853982
        %vm2080 = vcmp.lt.s32.totalorder %v929, 0
        %v2081 = vand.u32 %v929, 2139095040
        %v2082 = vshrl.u32 %v2081, 23
        %v2083 = vsub.s32 %v2082, 127
        %v2084 = vand.u32 2147483647, %v929
        %v2085 = vand.u32 %v2084, 8388607
        %v2086 = vor.u32 %v2085, 8388608
        %v2087 = vsub.s32 0, %v2086
        %v2088 = vadd.s32 %v2083, 1
        %vm2089 = vcmp.gt.s32.totalorder %v2088, 0
        %v2090 = vsel %vm2089, %v2088, 0
        %v2091 = vshrl.u32 %v2090, 5
        %v2092 = vand.u32 %v2090, 31
        %v2093 = vsub.s32 32, %v2092
        %v2094 = vshrl.u32 683565275, %v2093
        %v2095 = vshll.u32 683565275, %v2092
        %v2096 = vshrl.u32 2475754826, %v2093
        %v2097 = vor.u32 %v2095, %v2096
        %v2098 = vshll.u32 2475754826, %v2092
        %v2099 = vshrl.u32 2131351028, %v2093
        %v2100 = vor.u32 %v2098, %v2099
        %v2101 = vshll.u32 2131351028, %v2092
        %v2102 = vshrl.u32 2102212464, %v2093
        %v2103 = vor.u32 %v2101, %v2102
        %v2104 = vshll.u32 2102212464, %v2092
        %v2105 = vshrl.u32 920167782, %v2093
        %v2106 = vor.u32 %v2104, %v2105
        %v2107 = vshll.u32 920167782, %v2092
        %v2108 = vshrl.u32 1326507024, %v2093
        %v2109 = vor.u32 %v2107, %v2108
        %vm2110 = vcmp.lt.s32.totalorder %v2091, 1
        %vm2111 = vcmp.lt.s32.totalorder %v2091, 2
        %vm2112 = vcmp.lt.s32.totalorder %v2091, 3
        %vm2113 = vcmp.lt.s32.totalorder %v2091, 4
        %v2114 = vsel %vm2110, %v2094, %v2097
        %v2115 = vsel %vm2113, %v2103, 2102212464
        %v2116 = vsel %vm2112, %v2100, %v2115
        %v2117 = vsel %vm2111, %v2114, %v2116
        %v2118 = vsel %vm2110, %v2097, %v2100
        %v2119 = vsel %vm2113, %v2106, 920167782
        %v2120 = vsel %vm2112, %v2103, %v2119
        %v2121 = vsel %vm2111, %v2118, %v2120
        %v2122 = vsel %vm2110, %v2100, %v2103
        %v2123 = vsel %vm2113, %v2109, 1326507024
        %v2124 = vsel %vm2112, %v2106, %v2123
        %v2125 = vsel %vm2111, %v2122, %v2124
        %v2126 = vshll.u32 %v2086, 8
        %v2127 = vmul.u32.u64.compose %v2126, %v2125
        %v2128 = vextract.low.u32 %v2127
        %v2129 = vextract.high.u32 %v2127
        %v2130 = vmul.u32.u64.compose %v2126, %v2121
        %v2131 = vextract.low.u32 %v2130
        %v2132 = vextract.high.u32 %v2130
        %v2133 = vmul.u32 %v2126, %v2117
        %v2134 = vadd.s32 %v2129, %v2131
        %vm2135 = vc.u32 %v2129, %v2131
        %v2136 = vadd.s32 %v2132, 1
        %v2137 = vsel %vm2135, %v2136, %v2132
        %v2138 = vadd.s32 %v2133, %v2137
        %v2139 = vadd.s32 %v2138, 536870912
        %v2140 = vshrl.u32 %v2139, 30
        %v2141 = vshll.u32 %v2140, 30
        %v2142 = vsub.s32 %v2138, %v2141
        %vm2143 = vcmp.lt.s32.totalorder %v2142, 0
        %v2144 = vsub.s32 0, %v2142
        %v2145 = vsel %vm2143, %v2144, %v2142
        %v2146 = vclz %v2145
        %v2147 = vsub.s32 %v2146, 2
        %vm2148 = vcmp.gt.s32.totalorder 0, %v2147
        %v2149 = vsel %vm2148, 0, %v2147
        %v2150 = vsub.s32 32, %v2149
        %v2151 = vshll.u32 %v2142, %v2149
        %v2152 = vshrl.u32 %v2134, %v2150
        %v2153 = vor.u32 %v2151, %v2152
        %v2154 = vsub.s32 4294967266, %v2149
        %v2155 = vadd.s32 %v2154, 127
        %v2156 = vshll.u32 %v2155, 23
        %v2157 = vor.u32 4788187, %v2156
        %v2158 = vand.u32 2147483647, %v2157
        %v2160 = vcvt.s32.f32 %v2153
        %v2161 = vmul.f32 %v2160, %v2158
        %v2162 = vxor.u32 %v2161, 2147483648
        %v2163 = vsel %vm2080, %v2162, %v2161
        %v2164 = vsub.s32 4, %v2140
        %v2165 = vsel %vm2080, %v2164, %v2140
        %v2166 = vsel %vm2079, %v929, %v2163
        %v2167 = vsel %vm2079, 0, %v2165
        %v2168 = vcosq.f32.pop %v2166
        %v2169 = vsinq.f32.pop %v2166
        %vm2170 = vweird.f32 %v929
        %v2171 = vadd.s32 %v2167, 3
        %v2172 = vand.u32 %v2171, 3
        %vm2173 = vcmp.lt.s32.totalorder %v2172, 2
        %vm2174 = vcmp.eq.s32.totalorder %v2172, 0
        %v2175 = vxor.u32 %v2169, 2147483648
        %v2176 = vsel %vm2174, %v2168, %v2175
        %vm2177 = vcmp.eq.s32.totalorder %v2172, 2
        %v2178 = vxor.u32 %v2168, 2147483648
        %v2179 = vsel %vm2177, %v2178, %v2169
        %v2180 = vsel %vm2173, %v2176, %v2179
        %v2181 = vsel %vm2170, nan, %v2180
        %v2182 = vand.u32 2147483647, %v930
        %vm2183 = vcmp.le.f32.partialorder %v2182, 0.7853982
        %vm2184 = vcmp.lt.s32.totalorder %v930, 0
        %v2185 = vand.u32 %v930, 2139095040
        %v2186 = vshrl.u32 %v2185, 23
        %v2187 = vsub.s32 %v2186, 127
        %v2188 = vand.u32 2147483647, %v930
        %v2189 = vand.u32 %v2188, 8388607
        %v2190 = vor.u32 %v2189, 8388608
        %v2191 = vsub.s32 0, %v2190
        %v2192 = vadd.s32 %v2187, 1
        %vm2193 = vcmp.gt.s32.totalorder %v2192, 0
        %v2194 = vsel %vm2193, %v2192, 0
        %v2195 = vshrl.u32 %v2194, 5
        %v2196 = vand.u32 %v2194, 31
        %v2197 = vsub.s32 32, %v2196
        %v2198 = vshrl.u32 683565275, %v2197
        %v2199 = vshll.u32 683565275, %v2196
        %v2200 = vshrl.u32 2475754826, %v2197
        %v2201 = vor.u32 %v2199, %v2200
        %v2202 = vshll.u32 2475754826, %v2196
        %v2203 = vshrl.u32 2131351028, %v2197
        %v2204 = vor.u32 %v2202, %v2203
        %v2205 = vshll.u32 2131351028, %v2196
        %v2206 = vshrl.u32 2102212464, %v2197
        %v2207 = vor.u32 %v2205, %v2206
        %v2208 = vshll.u32 2102212464, %v2196
        %v2209 = vshrl.u32 920167782, %v2197
        %v2210 = vor.u32 %v2208, %v2209
        %v2211 = vshll.u32 920167782, %v2196
        %v2212 = vshrl.u32 1326507024, %v2197
        %v2213 = vor.u32 %v2211, %v2212
        %vm2214 = vcmp.lt.s32.totalorder %v2195, 1
        %vm2215 = vcmp.lt.s32.totalorder %v2195, 2
        %vm2216 = vcmp.lt.s32.totalorder %v2195, 3
        %vm2217 = vcmp.lt.s32.totalorder %v2195, 4
        %v2218 = vsel %vm2214, %v2198, %v2201
        %v2219 = vsel %vm2217, %v2207, 2102212464
        %v2220 = vsel %vm2216, %v2204, %v2219
        %v2221 = vsel %vm2215, %v2218, %v2220
        %v2222 = vsel %vm2214, %v2201, %v2204
        %v2223 = vsel %vm2217, %v2210, 920167782
        %v2224 = vsel %vm2216, %v2207, %v2223
        %v2225 = vsel %vm2215, %v2222, %v2224
        %v2226 = vsel %vm2214, %v2204, %v2207
        %v2227 = vsel %vm2217, %v2213, 1326507024
        %v2228 = vsel %vm2216, %v2210, %v2227
        %v2229 = vsel %vm2215, %v2226, %v2228
        %v2230 = vshll.u32 %v2190, 8
        %v2231 = vmul.u32.u64.compose %v2230, %v2229
        %v2232 = vextract.low.u32 %v2231
        %v2233 = vextract.high.u32 %v2231
        %v2234 = vmul.u32.u64.compose %v2230, %v2225
        %v2235 = vextract.low.u32 %v2234
        %v2236 = vextract.high.u32 %v2234
        %v2237 = vmul.u32 %v2230, %v2221
        %v2238 = vadd.s32 %v2233, %v2235
        %vm2239 = vc.u32 %v2233, %v2235
        %v2240 = vadd.s32 %v2236, 1
        %v2241 = vsel %vm2239, %v2240, %v2236
        %v2242 = vadd.s32 %v2237, %v2241
        %v2243 = vadd.s32 %v2242, 536870912
        %v2244 = vshrl.u32 %v2243, 30
        %v2245 = vshll.u32 %v2244, 30
        %v2246 = vsub.s32 %v2242, %v2245
        %vm2247 = vcmp.lt.s32.totalorder %v2246, 0
        %v2248 = vsub.s32 0, %v2246
        %v2249 = vsel %vm2247, %v2248, %v2246
        %v2250 = vclz %v2249
        %v2251 = vsub.s32 %v2250, 2
        %vm2252 = vcmp.gt.s32.totalorder 0, %v2251
        %v2253 = vsel %vm2252, 0, %v2251
        %v2254 = vsub.s32 32, %v2253
        %v2255 = vshll.u32 %v2246, %v2253
        %v2256 = vshrl.u32 %v2238, %v2254
        %v2257 = vor.u32 %v2255, %v2256
        %v2258 = vsub.s32 4294967266, %v2253
        %v2259 = vadd.s32 %v2258, 127
        %v2260 = vshll.u32 %v2259, 23
        %v2261 = vor.u32 4788187, %v2260
        %v2262 = vand.u32 2147483647, %v2261
        %v2264 = vcvt.s32.f32 %v2257
        %v2265 = vmul.f32 %v2264, %v2262
        %v2266 = vxor.u32 %v2265, 2147483648
        %v2267 = vsel %vm2184, %v2266, %v2265
        %v2268 = vsub.s32 4, %v2244
        %v2269 = vsel %vm2184, %v2268, %v2244
        %v2270 = vsel %vm2183, %v930, %v2267
        %v2271 = vsel %vm2183, 0, %v2269
        %v2272 = vcosq.f32.pop %v2270
        %v2273 = vsinq.f32.pop %v2270
        %vm2274 = vweird.f32 %v930
        %v2275 = vadd.s32 %v2271, 3
        %v2276 = vand.u32 %v2275, 3
        %vm2277 = vcmp.lt.s32.totalorder %v2276, 2
        %vm2278 = vcmp.eq.s32.totalorder %v2276, 0
        %v2279 = vxor.u32 %v2273, 2147483648
        %v2280 = vsel %vm2278, %v2272, %v2279
        %vm2281 = vcmp.eq.s32.totalorder %v2276, 2
        %v2282 = vxor.u32 %v2272, 2147483648
        %v2283 = vsel %vm2281, %v2282, %v2273
        %v2284 = vsel %vm2277, %v2280, %v2283
        %v2285 = vsel %vm2274, nan, %v2284
        %v2286 = vand.u32 2147483647, %v931
        %vm2287 = vcmp.le.f32.partialorder %v2286, 0.7853982
        %vm2288 = vcmp.lt.s32.totalorder %v931, 0
        %v2289 = vand.u32 %v931, 2139095040
        %v2290 = vshrl.u32 %v2289, 23
        %v2291 = vsub.s32 %v2290, 127
        %v2292 = vand.u32 2147483647, %v931
        %v2293 = vand.u32 %v2292, 8388607
        %v2294 = vor.u32 %v2293, 8388608
        %v2295 = vsub.s32 0, %v2294
        %v2296 = vadd.s32 %v2291, 1
        %vm2297 = vcmp.gt.s32.totalorder %v2296, 0
        %v2298 = vsel %vm2297, %v2296, 0
        %v2299 = vshrl.u32 %v2298, 5
        %v2300 = vand.u32 %v2298, 31
        %v2301 = vsub.s32 32, %v2300
        %v2302 = vshrl.u32 683565275, %v2301
        %v2303 = vshll.u32 683565275, %v2300
        %v2304 = vshrl.u32 2475754826, %v2301
        %v2305 = vor.u32 %v2303, %v2304
        %v2306 = vshll.u32 2475754826, %v2300
        %v2307 = vshrl.u32 2131351028, %v2301
        %v2308 = vor.u32 %v2306, %v2307
        %v2309 = vshll.u32 2131351028, %v2300
        %v2310 = vshrl.u32 2102212464, %v2301
        %v2311 = vor.u32 %v2309, %v2310
        %v2312 = vshll.u32 2102212464, %v2300
        %v2313 = vshrl.u32 920167782, %v2301
        %v2314 = vor.u32 %v2312, %v2313
        %v2315 = vshll.u32 920167782, %v2300
        %v2316 = vshrl.u32 1326507024, %v2301
        %v2317 = vor.u32 %v2315, %v2316
        %vm2318 = vcmp.lt.s32.totalorder %v2299, 1
        %vm2319 = vcmp.lt.s32.totalorder %v2299, 2
        %vm2320 = vcmp.lt.s32.totalorder %v2299, 3
        %vm2321 = vcmp.lt.s32.totalorder %v2299, 4
        %v2322 = vsel %vm2318, %v2302, %v2305
        %v2323 = vsel %vm2321, %v2311, 2102212464
        %v2324 = vsel %vm2320, %v2308, %v2323
        %v2325 = vsel %vm2319, %v2322, %v2324
        %v2326 = vsel %vm2318, %v2305, %v2308
        %v2327 = vsel %vm2321, %v2314, 920167782
        %v2328 = vsel %vm2320, %v2311, %v2327
        %v2329 = vsel %vm2319, %v2326, %v2328
        %v2330 = vsel %vm2318, %v2308, %v2311
        %v2331 = vsel %vm2321, %v2317, 1326507024
        %v2332 = vsel %vm2320, %v2314, %v2331
        %v2333 = vsel %vm2319, %v2330, %v2332
        %v2334 = vshll.u32 %v2294, 8
        %v2335 = vmul.u32.u64.compose %v2334, %v2333
        %v2336 = vextract.low.u32 %v2335
        %v2337 = vextract.high.u32 %v2335
        %v2338 = vmul.u32.u64.compose %v2334, %v2329
        %v2339 = vextract.low.u32 %v2338
        %v2340 = vextract.high.u32 %v2338
        %v2341 = vmul.u32 %v2334, %v2325
        %v2342 = vadd.s32 %v2337, %v2339
        %vm2343 = vc.u32 %v2337, %v2339
        %v2344 = vadd.s32 %v2340, 1
        %v2345 = vsel %vm2343, %v2344, %v2340
        %v2346 = vadd.s32 %v2341, %v2345
        %v2347 = vadd.s32 %v2346, 536870912
        %v2348 = vshrl.u32 %v2347, 30
        %v2349 = vshll.u32 %v2348, 30
        %v2350 = vsub.s32 %v2346, %v2349
        %vm2351 = vcmp.lt.s32.totalorder %v2350, 0
        %v2352 = vsub.s32 0, %v2350
        %v2353 = vsel %vm2351, %v2352, %v2350
        %v2354 = vclz %v2353
        %v2355 = vsub.s32 %v2354, 2
        %vm2356 = vcmp.gt.s32.totalorder 0, %v2355
        %v2357 = vsel %vm2356, 0, %v2355
        %v2358 = vsub.s32 32, %v2357
        %v2359 = vshll.u32 %v2350, %v2357
        %v2360 = vshrl.u32 %v2342, %v2358
        %v2361 = vor.u32 %v2359, %v2360
        %v2362 = vsub.s32 4294967266, %v2357
        %v2363 = vadd.s32 %v2362, 127
        %v2364 = vshll.u32 %v2363, 23
        %v2365 = vor.u32 4788187, %v2364
        %v2366 = vand.u32 2147483647, %v2365
        %v2368 = vcvt.s32.f32 %v2361
        %v2369 = vmul.f32 %v2368, %v2366
        %v2370 = vxor.u32 %v2369, 2147483648
        %v2371 = vsel %vm2288, %v2370, %v2369
        %v2372 = vsub.s32 4, %v2348
        %v2373 = vsel %vm2288, %v2372, %v2348
        %v2374 = vsel %vm2287, %v931, %v2371
        %v2375 = vsel %vm2287, 0, %v2373
        %v2376 = vcosq.f32.pop %v2374
        %v2377 = vsinq.f32.pop %v2374
        %vm2378 = vweird.f32 %v931
        %v2379 = vadd.s32 %v2375, 3
        %v2380 = vand.u32 %v2379, 3
        %vm2381 = vcmp.lt.s32.totalorder %v2380, 2
        %vm2382 = vcmp.eq.s32.totalorder %v2380, 0
        %v2383 = vxor.u32 %v2377, 2147483648
        %v2384 = vsel %vm2382, %v2376, %v2383
        %vm2385 = vcmp.eq.s32.totalorder %v2380, 2
        %v2386 = vxor.u32 %v2376, 2147483648
        %v2387 = vsel %vm2385, %v2386, %v2377
        %v2388 = vsel %vm2381, %v2384, %v2387
        %v2389 = vsel %vm2378, nan, %v2388
        %v2390 = vand.u32 2147483647, %v932
        %vm2391 = vcmp.le.f32.partialorder %v2390, 0.7853982
        %vm2392 = vcmp.lt.s32.totalorder %v932, 0
        %v2393 = vand.u32 %v932, 2139095040
        %v2394 = vshrl.u32 %v2393, 23
        %v2395 = vsub.s32 %v2394, 127
        %v2396 = vand.u32 2147483647, %v932
        %v2397 = vand.u32 %v2396, 8388607
        %v2398 = vor.u32 %v2397, 8388608
        %v2399 = vsub.s32 0, %v2398
        %v2400 = vadd.s32 %v2395, 1
        %vm2401 = vcmp.gt.s32.totalorder %v2400, 0
        %v2402 = vsel %vm2401, %v2400, 0
        %v2403 = vshrl.u32 %v2402, 5
        %v2404 = vand.u32 %v2402, 31
        %v2405 = vsub.s32 32, %v2404
        %v2406 = vshrl.u32 683565275, %v2405
        %v2407 = vshll.u32 683565275, %v2404
        %v2408 = vshrl.u32 2475754826, %v2405
        %v2409 = vor.u32 %v2407, %v2408
        %v2410 = vshll.u32 2475754826, %v2404
        %v2411 = vshrl.u32 2131351028, %v2405
        %v2412 = vor.u32 %v2410, %v2411
        %v2413 = vshll.u32 2131351028, %v2404
        %v2414 = vshrl.u32 2102212464, %v2405
        %v2415 = vor.u32 %v2413, %v2414
        %v2416 = vshll.u32 2102212464, %v2404
        %v2417 = vshrl.u32 920167782, %v2405
        %v2418 = vor.u32 %v2416, %v2417
        %v2419 = vshll.u32 920167782, %v2404
        %v2420 = vshrl.u32 1326507024, %v2405
        %v2421 = vor.u32 %v2419, %v2420
        %vm2422 = vcmp.lt.s32.totalorder %v2403, 1
        %vm2423 = vcmp.lt.s32.totalorder %v2403, 2
        %vm2424 = vcmp.lt.s32.totalorder %v2403, 3
        %vm2425 = vcmp.lt.s32.totalorder %v2403, 4
        %v2426 = vsel %vm2422, %v2406, %v2409
        %v2427 = vsel %vm2425, %v2415, 2102212464
        %v2428 = vsel %vm2424, %v2412, %v2427
        %v2429 = vsel %vm2423, %v2426, %v2428
        %v2430 = vsel %vm2422, %v2409, %v2412
        %v2431 = vsel %vm2425, %v2418, 920167782
        %v2432 = vsel %vm2424, %v2415, %v2431
        %v2433 = vsel %vm2423, %v2430, %v2432
        %v2434 = vsel %vm2422, %v2412, %v2415
        %v2435 = vsel %vm2425, %v2421, 1326507024
        %v2436 = vsel %vm2424, %v2418, %v2435
        %v2437 = vsel %vm2423, %v2434, %v2436
        %v2438 = vshll.u32 %v2398, 8
        %v2439 = vmul.u32.u64.compose %v2438, %v2437
        %v2440 = vextract.low.u32 %v2439
        %v2441 = vextract.high.u32 %v2439
        %v2442 = vmul.u32.u64.compose %v2438, %v2433
        %v2443 = vextract.low.u32 %v2442
        %v2444 = vextract.high.u32 %v2442
        %v2445 = vmul.u32 %v2438, %v2429
        %v2446 = vadd.s32 %v2441, %v2443
        %vm2447 = vc.u32 %v2441, %v2443
        %v2448 = vadd.s32 %v2444, 1
        %v2449 = vsel %vm2447, %v2448, %v2444
        %v2450 = vadd.s32 %v2445, %v2449
        %v2451 = vadd.s32 %v2450, 536870912
        %v2452 = vshrl.u32 %v2451, 30
        %v2453 = vshll.u32 %v2452, 30
        %v2454 = vsub.s32 %v2450, %v2453
        %vm2455 = vcmp.lt.s32.totalorder %v2454, 0
        %v2456 = vsub.s32 0, %v2454
        %v2457 = vsel %vm2455, %v2456, %v2454
        %v2458 = vclz %v2457
        %v2459 = vsub.s32 %v2458, 2
        %vm2460 = vcmp.gt.s32.totalorder 0, %v2459
        %v2461 = vsel %vm2460, 0, %v2459
        %v2462 = vsub.s32 32, %v2461
        %v2463 = vshll.u32 %v2454, %v2461
        %v2464 = vshrl.u32 %v2446, %v2462
        %v2465 = vor.u32 %v2463, %v2464
        %v2466 = vsub.s32 4294967266, %v2461
        %v2467 = vadd.s32 %v2466, 127
        %v2468 = vshll.u32 %v2467, 23
        %v2469 = vor.u32 4788187, %v2468
        %v2470 = vand.u32 2147483647, %v2469
        %v2472 = vcvt.s32.f32 %v2465
        %v2473 = vmul.f32 %v2472, %v2470
        %v2474 = vxor.u32 %v2473, 2147483648
        %v2475 = vsel %vm2392, %v2474, %v2473
        %v2476 = vsub.s32 4, %v2452
        %v2477 = vsel %vm2392, %v2476, %v2452
        %v2478 = vsel %vm2391, %v932, %v2475
        %v2479 = vsel %vm2391, 0, %v2477
        %v2480 = vcosq.f32.pop %v2478
        %v2481 = vsinq.f32.pop %v2478
        %vm2482 = vweird.f32 %v932
        %v2483 = vadd.s32 %v2479, 3
        %v2484 = vand.u32 %v2483, 3
        %vm2485 = vcmp.lt.s32.totalorder %v2484, 2
        %vm2486 = vcmp.eq.s32.totalorder %v2484, 0
        %v2487 = vxor.u32 %v2481, 2147483648
        %v2488 = vsel %vm2486, %v2480, %v2487
        %vm2489 = vcmp.eq.s32.totalorder %v2484, 2
        %v2490 = vxor.u32 %v2480, 2147483648
        %v2491 = vsel %vm2489, %v2490, %v2481
        %v2492 = vsel %vm2485, %v2488, %v2491
        %v2493 = vsel %vm2482, nan, %v2492
        %v2494 = vand.u32 2147483647, %v933
        %vm2495 = vcmp.le.f32.partialorder %v2494, 0.7853982
        %vm2496 = vcmp.lt.s32.totalorder %v933, 0
        %v2497 = vand.u32 %v933, 2139095040
        %v2498 = vshrl.u32 %v2497, 23
        %v2499 = vsub.s32 %v2498, 127
        %v2500 = vand.u32 2147483647, %v933
        %v2501 = vand.u32 %v2500, 8388607
        %v2502 = vor.u32 %v2501, 8388608
        %v2503 = vsub.s32 0, %v2502
        %v2504 = vadd.s32 %v2499, 1
        %vm2505 = vcmp.gt.s32.totalorder %v2504, 0
        %v2506 = vsel %vm2505, %v2504, 0
        %v2507 = vshrl.u32 %v2506, 5
        %v2508 = vand.u32 %v2506, 31
        %v2509 = vsub.s32 32, %v2508
        %v2510 = vshrl.u32 683565275, %v2509
        %v2511 = vshll.u32 683565275, %v2508
        %v2512 = vshrl.u32 2475754826, %v2509
        %v2513 = vor.u32 %v2511, %v2512
        %v2514 = vshll.u32 2475754826, %v2508
        %v2515 = vshrl.u32 2131351028, %v2509
        %v2516 = vor.u32 %v2514, %v2515
        %v2517 = vshll.u32 2131351028, %v2508
        %v2518 = vshrl.u32 2102212464, %v2509
        %v2519 = vor.u32 %v2517, %v2518
        %v2520 = vshll.u32 2102212464, %v2508
        %v2521 = vshrl.u32 920167782, %v2509
        %v2522 = vor.u32 %v2520, %v2521
        %v2523 = vshll.u32 920167782, %v2508
        %v2524 = vshrl.u32 1326507024, %v2509
        %v2525 = vor.u32 %v2523, %v2524
        %vm2526 = vcmp.lt.s32.totalorder %v2507, 1
        %vm2527 = vcmp.lt.s32.totalorder %v2507, 2
        %vm2528 = vcmp.lt.s32.totalorder %v2507, 3
        %vm2529 = vcmp.lt.s32.totalorder %v2507, 4
        %v2530 = vsel %vm2526, %v2510, %v2513
        %v2531 = vsel %vm2529, %v2519, 2102212464
        %v2532 = vsel %vm2528, %v2516, %v2531
        %v2533 = vsel %vm2527, %v2530, %v2532
        %v2534 = vsel %vm2526, %v2513, %v2516
        %v2535 = vsel %vm2529, %v2522, 920167782
        %v2536 = vsel %vm2528, %v2519, %v2535
        %v2537 = vsel %vm2527, %v2534, %v2536
        %v2538 = vsel %vm2526, %v2516, %v2519
        %v2539 = vsel %vm2529, %v2525, 1326507024
        %v2540 = vsel %vm2528, %v2522, %v2539
        %v2541 = vsel %vm2527, %v2538, %v2540
        %v2542 = vshll.u32 %v2502, 8
        %v2543 = vmul.u32.u64.compose %v2542, %v2541
        %v2544 = vextract.low.u32 %v2543
        %v2545 = vextract.high.u32 %v2543
        %v2546 = vmul.u32.u64.compose %v2542, %v2537
        %v2547 = vextract.low.u32 %v2546
        %v2548 = vextract.high.u32 %v2546
        %v2549 = vmul.u32 %v2542, %v2533
        %v2550 = vadd.s32 %v2545, %v2547
        %vm2551 = vc.u32 %v2545, %v2547
        %v2552 = vadd.s32 %v2548, 1
        %v2553 = vsel %vm2551, %v2552, %v2548
        %v2554 = vadd.s32 %v2549, %v2553
        %v2555 = vadd.s32 %v2554, 536870912
        %v2556 = vshrl.u32 %v2555, 30
        %v2557 = vshll.u32 %v2556, 30
        %v2558 = vsub.s32 %v2554, %v2557
        %vm2559 = vcmp.lt.s32.totalorder %v2558, 0
        %v2560 = vsub.s32 0, %v2558
        %v2561 = vsel %vm2559, %v2560, %v2558
        %v2562 = vclz %v2561
        %v2563 = vsub.s32 %v2562, 2
        %vm2564 = vcmp.gt.s32.totalorder 0, %v2563
        %v2565 = vsel %vm2564, 0, %v2563
        %v2566 = vsub.s32 32, %v2565
        %v2567 = vshll.u32 %v2558, %v2565
        %v2568 = vshrl.u32 %v2550, %v2566
        %v2569 = vor.u32 %v2567, %v2568
        %v2570 = vsub.s32 4294967266, %v2565
        %v2571 = vadd.s32 %v2570, 127
        %v2572 = vshll.u32 %v2571, 23
        %v2573 = vor.u32 4788187, %v2572
        %v2574 = vand.u32 2147483647, %v2573
        %v2576 = vcvt.s32.f32 %v2569
        %v2577 = vmul.f32 %v2576, %v2574
        %v2578 = vxor.u32 %v2577, 2147483648
        %v2579 = vsel %vm2496, %v2578, %v2577
        %v2580 = vsub.s32 4, %v2556
        %v2581 = vsel %vm2496, %v2580, %v2556
        %v2582 = vsel %vm2495, %v933, %v2579
        %v2583 = vsel %vm2495, 0, %v2581
        %v2584 = vcosq.f32.pop %v2582
        %v2585 = vsinq.f32.pop %v2582
        %vm2586 = vweird.f32 %v933
        %v2587 = vadd.s32 %v2583, 3
        %v2588 = vand.u32 %v2587, 3
        %vm2589 = vcmp.lt.s32.totalorder %v2588, 2
        %vm2590 = vcmp.eq.s32.totalorder %v2588, 0
        %v2591 = vxor.u32 %v2585, 2147483648
        %v2592 = vsel %vm2590, %v2584, %v2591
        %vm2593 = vcmp.eq.s32.totalorder %v2588, 2
        %v2594 = vxor.u32 %v2584, 2147483648
        %v2595 = vsel %vm2593, %v2594, %v2585
        %v2596 = vsel %vm2589, %v2592, %v2595
        %v2597 = vsel %vm2586, nan, %v2596
        %v2598 = vadd.f32 %v1037, %v1141
        %v2599 = vadd.f32 %v2598, %v1245
        %v2600 = vadd.f32 %v2599, %v1349
        %v2601 = vadd.f32 %v2600, %v1453
        %v2602 = vadd.f32 %v2601, %v1557
        %v2603 = vadd.f32 %v2602, %v1661
        %v2604 = vadd.f32 %v2603, %v1765
        %2605 = vadd.xlane.f32.xlu0 %v2604
        %v2606 = vpop.xlane.xlu0 %2605
        %v2607 = vadd.f32 %v1869, %v1973
        %v2608 = vadd.f32 %v2607, %v2077
        %v2609 = vadd.f32 %v2608, %v2181
        %v2610 = vadd.f32 %v2609, %v2285
        %v2611 = vadd.f32 %v2610, %v2389
        %v2612 = vadd.f32 %v2611, %v2493
        %v2613 = vadd.f32 %v2612, %v2597
        %2614 = vadd.xlane.f32.xlu0 %v2613
        %v2615 = vpop.xlane.xlu0 %2614
        %v2616 = vstv %s917
        %v2617 = vmul.f32 %v2616, %v2606
        %v2618 = vmul.f32 %v2616, %v2615
        %v2619 = vstv %s916
        %v2620 = vadd.f32 %v2619, %v2617
        %v2621 = vadd.f32 %v2619, %v2618
        %s2622 = sld [smem:[#allocation2 + $0x2]]
        %v2623 = vstv %s2622
        %v2624 = vmul.f32 %v2623, %v910
        %v2625 = vmul.f32 %v2623, %v913
        %v2626 = vadd.f32 %v2624, 0.0
        %v2627 = vadd.f32 %v2625, 0.0
        %2630 = vrot.lane.b32.xlu0 %v910, 124
        %v2631 = vpop.permute.xlu0 %2630
        %2632 = vrot.lane.b32.xlu0 %v913, 124
        %v2633 = vpop.permute.xlu0 %2632
        %v2636 = vmul.f32 %v910, %v2631
        %v2637 = vmul.f32 %v913, %v2633
        %s2638 = sld [smem:[#allocation2 + $0x3]]
        %v2639 = vstv %s2638
        %v2640 = vmul.f32 %v2639, %v2636
        %v2641 = vmul.f32 %v2639, %v2637
        %2644 = vrot.lane.b32.xlu0 %v2640, 124
        %v2645 = vpop.permute.xlu0 %2644
        %2646 = vrot.lane.b32.xlu0 %v2641, 124
        %v2647 = vpop.permute.xlu0 %2646
        %v2650 = vadd.f32 %v2626, %v2645
        %v2651 = vadd.f32 %v2627, %v2647
        %2652 = vrot.lane.b32.xlu0 %v910, 120
        %v2653 = vpop.permute.xlu0 %2652
        %2654 = vrot.lane.b32.xlu0 %v913, 120
        %v2655 = vpop.permute.xlu0 %2654
        %v2658 = vmul.f32 %v2636, %v2653
        %v2659 = vmul.f32 %v2637, %v2655
        %s2660 = sld [smem:[#allocation2 + $0x4]]
        %v2661 = vstv %s2660
        %v2662 = vmul.f32 %v2661, %v2658
        %v2663 = vmul.f32 %v2661, %v2659
        %2666 = vrot.lane.b32.xlu0 %v2662, 116
        %v2667 = vpop.permute.xlu0 %2666
        %2668 = vrot.lane.b32.xlu0 %v2663, 116
        %v2669 = vpop.permute.xlu0 %2668
        %v2672 = vadd.f32 %v2650, %v2667
        %v2673 = vadd.f32 %v2651, %v2669
        %vm2674 = vcmask 31744
        %v2675 = vsel %vm2674, %v2672, 0.0
        %2676 = vadd.xlane.f32.xlu0 %v2675
        %v2677 = vpop.xlane.xlu0 %2676
        %v2678 = vsel %vm2674, %v2673, 0.0
        %2679 = vadd.xlane.f32.xlu0 %v2678
        %v2680 = vpop.xlane.xlu0 %2679
        %v2681 = vadd.f32 %v2620, %v2677
        %v2682 = vadd.f32 %v2621, %v2680
        %vm2683 = vcmask 7168
        %2684 = vst.msk [vmem:[%s189] sm:$0xff] %vm2683, %v2681
        %2685 = vst.msk [vmem:[%s189 + $0x8] sm:$0xff] %vm2683, %v2682
        %s2686 = smul.u32 2, %s15
        %p2687 = scmp.lt.s32.totalorder %s2686, 3
        %s2688 = scalar_select %p2687, %s2686, 3
        %s2689 = smul.addr %s2688, 8
        %s2690 = scalar_lea.vmem %s3, %s2689
        // Predicated region
        $region37: #{poly_tensor_regression_forward.1} parent=31 // pred_check
          %p2691 = pneg %p101
        $region38: #{poly_tensor_regression_forward.1} parent=31 // pred_check_branch
          %2693 = sbr.rel (%p2691) target = $region40
        $region39: #{poly_tensor_regression_forward.1} parent=31 // pred_region
          %s2694 = smul.u32 2, %s15
        $region40: #{poly_tensor_regression_forward.1} parent=31 // pred_fallthru
          _
      $region32: #{poly_tensor_regression_forward.1} parent=5 // pred_fallthru
        _
      %p2695 = scmp.le.s32.totalorder 2, %s10
      // Predicated region
      $region41: #{poly_tensor_regression_forward.1} parent=5 // pred_check
        %p2696 = pneg %p2695
      $region42: #{poly_tensor_regression_forward.1} parent=5 // pred_check_branch
        %2698 = sbr.rel (%p2696) target = $region44
      $region43: #{poly_tensor_regression_forward.1} parent=5 // pred_region
        %s2699 = ssub.s32 %s10, 2
        // Predicated region
        $region45: #{poly_tensor_regression_forward.1} parent=43 // pred_check
          %p2700 = pneg %p107
        $region46: #{poly_tensor_regression_forward.1} parent=43 // pred_check_branch
          %2702 = sbr.rel (%p2700) target = $region48
        $region47: #{poly_tensor_regression_forward.1} parent=43 // pred_region
          %s2703 = smul.u32 2, %s16
          %p2704 = scmp.lt.s32.totalorder %s2703, 3
          %s2705 = scalar_select %p2704, %s2703, 3
          %s2706 = smul.addr %s2705, 8
          %s2707 = scalar_lea.vmem %s3, %s2706
        $region48: #{poly_tensor_regression_forward.1} parent=43 // pred_fallthru
          _
      $region44: #{poly_tensor_regression_forward.1} parent=5 // pred_fallthru
        _
    $region6: #{poly_tensor_regression_forward.1} parent=1 // loop_footer
      %s14 = sadd.s32 1, %s10
    $region7: #{poly_tensor_regression_forward.1} parent=1 // loop_footer_branch
      %9 = sbr.rel target = $region3
    $region8: #{poly_tensor_regression_forward.1} parent=1 // loop_exit
      _
    %2708 = vsyncpa [#allocation3], 1
    %s2709 = scalar_lea.sflag [#allocation3], 1
    %2710 = vsyncpa %s2709, 1

</llo_original>
